<compile_context>
chip_gen: v6e
topology: v6e:2x2x1
jax: 0.10.0
libtpu: 0.0.40
codegen_flags: <defaults>
</compile_context>

<pallas_src>
import functools

import jax
import jax.numpy as jnp
from jax.experimental import pallas as pl
from jax.experimental.pallas import tpu as pltpu

C_S = 384           # structure-module single representation width (fixed by module)
NUM_CHANNELS = 128  # config['num_channels']
NUM_BINS = 50       # config['num_bins']
LN_EPS = 1e-5       # torch.nn.LayerNorm default
LANE = 128
SUBLANE = 8


def _round_up(x, m):
    return ((x + m - 1) // m) * m


def _plddt_kernel(x_ref, gamma_ref, beta_ref,
                  w0_ref, b0_ref, w1_ref, b1_ref, w2_ref, b2_ref,
                  out_ref, *, matmul_dtype):
    # ---- LayerNorm over the feature axis (size 384), always in f32 ----
    x = x_ref[...].astype(jnp.float32)                     # (TM, C_S)
    mean = jnp.mean(x, axis=-1, keepdims=True)              # (TM, 1)
    mean_sq = jnp.mean(x * x, axis=-1, keepdims=True)       # same pass; x hot in vregs
    var = mean_sq - mean * mean
    inv = jax.lax.rsqrt(var + LN_EPS)
    act = (x - mean) * inv * gamma_ref[...] + beta_ref[...]  # (TM, C_S)

    # ---- Linear 384 -> num_channels, relu (bf16 operands, f32 accumulate) ----
    h0 = jnp.dot(act.astype(matmul_dtype), w0_ref[...],
                 preferred_element_type=jnp.float32) + b0_ref[...]
    h0 = jnp.maximum(h0, 0.0)

    # ---- Linear num_channels -> num_channels, relu ----
    h1 = jnp.dot(h0.astype(matmul_dtype), w1_ref[...],
                 preferred_element_type=jnp.float32) + b1_ref[...]
    h1 = jnp.maximum(h1, 0.0)

    # ---- Linear num_channels -> num_bins_padded (logits), lane-dense store ----
    logits = jnp.dot(h1.astype(matmul_dtype), w2_ref[...],
                     preferred_element_type=jnp.float32) + b2_ref[...]
    out_ref[...] = logits.astype(out_ref.dtype)


def _detect_num_tensorcores():
    """Best-effort TensorCore count for one device (v5e/v6e: 1, v7x: 2).

    Falls back to 1 if the attribute is unavailable so single-TC chips never
    pay extra grid steps for small N_res.
    """
    try:
        n = getattr(jax.devices()[0], "num_cores", None)
        return max(1, int(n)) if n is not None else 1
    except Exception:
        return 1


def _choose_tile_m(n_res, row_align, tile_m_max, num_tc):
    # Largest aligned row tile that does not exceed the array -> no row padding,
    # and the (8,128)/(16,128) min-tile constraints are always met.
    full = max(row_align, (n_res // row_align) * row_align)
    tile_m = min(max(row_align, tile_m_max), full)
    if num_tc > 1 and n_res > row_align:
        # Multi-TC chip (v7x): target >= ~4 grid steps per TensorCore so
        # BlockSpec double-buffering overlaps the x-tile read of step i+1 with
        # the logits writeback of step i-1.
        cap = max(row_align, _round_up(pl.cdiv(n_res, 4 * num_tc), row_align))
        tile_m = min(tile_m, cap)
    return tile_m


def predicted_lddt_head(structure_module_act, params, *, tile_m=512, use_bf16=True,
                        logits_dtype=jnp.float32, return_padded_logits=False,
                        num_tensorcores=None):
    """structure_module_act: [N_res, 384] (f32 or bf16 — bf16 halves input HBM traffic).

    Returns dict(logits=[N_res, num_bins]) (or [N_res, 128] lane-padded logits
    when return_padded_logits=True; padded columns are exact zeros).
    """
    x = structure_module_act
    n_res, c_s = x.shape
    assert c_s == C_S

    gamma, beta, w0, b0, w1, b1, w2, b2 = params
    num_ch = w0.shape[1]
    num_bins = w2.shape[1]
    matmul_dtype = jnp.bfloat16 if use_bf16 else jnp.float32

    # Lane-dense final Linear: pad output width to a multiple of 128 lanes so the
    # final stores are unmasked `vst`. Padded columns produce exact zeros.
    n_out = _round_up(num_bins, LANE)
    w2p = jnp.zeros((num_ch, n_out), w2.dtype).at[:, :num_bins].set(w2)
    b2p = jnp.zeros((1, n_out), b2.dtype).at[:, :num_bins].set(b2)

    # Cast matmul weight operands once; biases stay f32 (added post-accumulate).
    w0c = w0.astype(matmul_dtype)
    w1c = w1.astype(matmul_dtype)
    w2c = w2p.astype(matmul_dtype)

    # Row tiling. bf16 inputs need 16-row alignment (bf16 sublane packing).
    row_align = 16 if x.dtype == jnp.bfloat16 else SUBLANE
    num_tc = (_detect_num_tensorcores() if num_tensorcores is None
              else max(1, int(num_tensorcores)))
    tm = _choose_tile_m(n_res, row_align, tile_m, num_tc)
    grid = (pl.cdiv(n_res, tm),)   # ragged last block; masked write discards OOB rows

    # Weights/biases: full blocks with a constant block index — Pallas DMAs them
    # once and keeps them resident across all grid steps.
    full = lambda shape: pl.BlockSpec(shape, lambda i: (0,) * len(shape))

    flops = 2 * n_res * (c_s * num_ch + num_ch * num_ch + num_ch * n_out)
    bytes_accessed = (
        n_res * c_s * x.dtype.itemsize                              # input activations
        + n_res * n_out * jnp.dtype(logits_dtype).itemsize          # logits
        + (w0c.size + w1c.size + w2c.size) * jnp.dtype(matmul_dtype).itemsize
        + (gamma.size + beta.size + b0.size + b1.size + b2p.size) * 4)
    cost = pl.CostEstimate(flops=flops, transcendentals=n_res,
                           bytes_accessed=bytes_accessed)

    kernel = functools.partial(_plddt_kernel, matmul_dtype=matmul_dtype)

    logits_padded = pl.pallas_call(
        kernel,
        out_shape=jax.ShapeDtypeStruct((n_res, n_out), logits_dtype),
        grid_spec=pltpu.PrefetchScalarGridSpec(
            num_scalar_prefetch=0,
            grid=grid,
            in_specs=[
                pl.BlockSpec((tm, c_s), lambda i: (i, 0)),   # x (row tiled, ragged tail)
                full((1, c_s)),                               # gamma
                full((1, c_s)),                               # beta
                full((c_s, num_ch)),                          # W0
                full((1, num_ch)),                            # b0
                full((num_ch, num_ch)),                       # W1
                full((1, num_ch)),                            # b1
                full((num_ch, n_out)),                        # W2 (lane-padded)
                full((1, n_out)),                             # b2 (lane-padded)
            ],
            out_specs=pl.BlockSpec((tm, n_out), lambda i: (i, 0)),
        ),
        compiler_params=pltpu.CompilerParams(
            dimension_semantics=("parallel",)),
        cost_estimate=cost,
    )(x, gamma, beta, w0c, b0, w1c, b1, w2c, b2p)

    if return_padded_logits:
        # Caller is responsible for slicing/masking the first `num_bins` columns
        # before any softmax; padded columns are exact zeros.
        return dict(logits=logits_padded)
    return dict(logits=logits_padded[:, :num_bins])


def init_params(key):
    """Deterministic synthetic parameters with shapes implied by the module __init__."""
    ks = jax.random.split(key, 8)
    gamma = jnp.ones((1, C_S), jnp.float32)
    beta = jnp.zeros((1, C_S), jnp.float32)
    # Stored already transposed: [in_features, out_features]
    w0 = jax.random.normal(ks[0], (C_S, NUM_CHANNELS), jnp.float32) * 0.02
    b0 = jax.random.normal(ks[1], (1, NUM_CHANNELS), jnp.float32) * 0.01
    w1 = jax.random.normal(ks[2], (NUM_CHANNELS, NUM_CHANNELS), jnp.float32) * 0.02
    b1 = jax.random.normal(ks[3], (1, NUM_CHANNELS), jnp.float32) * 0.01
    w2 = jax.random.normal(ks[4], (NUM_CHANNELS, NUM_BINS), jnp.float32) * 0.02
    b2 = jax.random.normal(ks[5], (1, NUM_BINS), jnp.float32) * 0.01
    return (gamma, beta, w0, b0, w1, b1, w2, b2)


def reference_forward(x, params):
    gamma, beta, w0, b0, w1, b1, w2, b2 = params
    x = x.astype(jnp.float32)
    mean = jnp.mean(x, axis=-1, keepdims=True)
    var = jnp.mean((x - mean) ** 2, axis=-1, keepdims=True)
    act = (x - mean) * jax.lax.rsqrt(var + LN_EPS) * gamma + beta
    act = jax.nn.relu(act @ w0 + b0)
    act = jax.nn.relu(act @ w1 + b1)
    return act @ w2 + b2


if __name__ == "__main__":
    key = jax.random.PRNGKey(0)
    k_x, k_p = jax.random.split(key)

    N_RES = 200  # deliberately NOT a multiple of the tile size (exercises ragged grid)
    x = jax.random.normal(k_x, (N_RES, C_S), jnp.float32)
    params = init_params(k_p)
    ref = reference_forward(x, params)

    # f32 path: tight numerical check (no padding, single big tile on 1-TC parts).
    out_f32 = predicted_lddt_head(x, params, use_bf16=False)
    logits_f32 = jax.block_until_ready(out_f32["logits"])
    assert logits_f32.shape == (N_RES, NUM_BINS)
    assert jnp.allclose(logits_f32, ref, atol=1e-4, rtol=1e-3), "f32 mismatch vs reference"

    # bf16 input + bf16 MXU operands / f32 accumulation (the fast, mem-bound-optimal path).
    x_bf16 = x.astype(jnp.bfloat16)
    ref_b = reference_forward(x_bf16.astype(jnp.float32), params)
    out_b = predicted_lddt_head(x_bf16, params)          # use_bf16=True default
    logits_b = jax.block_until_ready(out_b["logits"])
    assert logits_b.shape == (N_RES, NUM_BINS)
    assert jnp.allclose(logits_b, ref_b, atol=5e-2, rtol=5e-2), "bf16 mismatch vs reference"

    # Lane-padded, bf16-logits variant (no post-call slice at all).
    out_pad = predicted_lddt_head(x_bf16, params, return_padded_logits=True,
                                  logits_dtype=jnp.bfloat16)
    logits_pad = jax.block_until_ready(out_pad["logits"])
    assert logits_pad.shape == (N_RES, _round_up(NUM_BINS, LANE))
    assert bool(jnp.all(logits_pad[:, NUM_BINS:] == 0.0)), "padded logit columns not zero"

    print("KERNEL_OK")
</pallas_src>

<mosaic_0001>
module attributes {stable_mosaic.version = 11 : i64} {
  func.func @_plddt_kernel(%arg0: i32, %arg1: memref<200x384xf32, #tpu.memory_space<vmem>>, %arg2: memref<1x384xf32, #tpu.memory_space<vmem>>, %arg3: memref<1x384xf32, #tpu.memory_space<vmem>>, %arg4: memref<384x128xf32, #tpu.memory_space<vmem>>, %arg5: memref<1x128xf32, #tpu.memory_space<vmem>>, %arg6: memref<128x128xf32, #tpu.memory_space<vmem>>, %arg7: memref<1x128xf32, #tpu.memory_space<vmem>>, %arg8: memref<128x128xf32, #tpu.memory_space<vmem>>, %arg9: memref<1x128xf32, #tpu.memory_space<vmem>>, %arg10: memref<200x128xf32, #tpu.memory_space<vmem>>) attributes {dimension_semantics = [#tpu.dimension_semantics<parallel>], iteration_bounds = array<i64: 1>, scalar_prefetch = 0 : i64, scratch_operands = 0 : i64, tpu.core_type = #tpu.core_type<tc>, window_params = [{transform_indices = @transform_0, window_bounds = array<i64: 200, 384>}, {pipeline_mode = #tpu.pipeline_mode<synchronous>, transform_indices = @transform_1, window_bounds = array<i64: 1, 384>}, {pipeline_mode = #tpu.pipeline_mode<synchronous>, transform_indices = @transform_2, window_bounds = array<i64: 1, 384>}, {pipeline_mode = #tpu.pipeline_mode<synchronous>, transform_indices = @transform_3, window_bounds = array<i64: 384, 128>}, {pipeline_mode = #tpu.pipeline_mode<synchronous>, transform_indices = @transform_4, window_bounds = array<i64: 1, 128>}, {pipeline_mode = #tpu.pipeline_mode<synchronous>, transform_indices = @transform_5, window_bounds = array<i64: 128, 128>}, {pipeline_mode = #tpu.pipeline_mode<synchronous>, transform_indices = @transform_6, window_bounds = array<i64: 1, 128>}, {pipeline_mode = #tpu.pipeline_mode<synchronous>, transform_indices = @transform_7, window_bounds = array<i64: 128, 128>}, {pipeline_mode = #tpu.pipeline_mode<synchronous>, transform_indices = @transform_8, window_bounds = array<i64: 1, 128>}, {transform_indices = @transform_9, window_bounds = array<i64: 200, 128>}]} {
    %c0 = arith.constant 0 : index
    %c0_0 = arith.constant 0 : index
    %0 = vector.load %arg1[%c0, %c0_0] : memref<200x384xf32, #tpu.memory_space<vmem>>, vector<200x384xf32>
    %cst = arith.constant dense<0.000000e+00> : vector<200xf32>
    %1 = vector.multi_reduction <add>, %0, %cst [1] : vector<200x384xf32> to vector<200xf32>
    %2 = vector.shape_cast %1 : vector<200xf32> to vector<200x1xf32>
    %cst_1 = arith.constant 3.840000e+02 : f32
    %3 = vector.broadcast %cst_1 : f32 to vector<200x1xf32>
    %4 = arith.divf %2, %3 : vector<200x1xf32>
    %5 = arith.mulf %0, %0 : vector<200x384xf32>
    %cst_2 = arith.constant dense<0.000000e+00> : vector<200xf32>
    %6 = vector.multi_reduction <add>, %5, %cst_2 [1] : vector<200x384xf32> to vector<200xf32>
    %7 = vector.shape_cast %6 : vector<200xf32> to vector<200x1xf32>
    %cst_3 = arith.constant 3.840000e+02 : f32
    %8 = vector.broadcast %cst_3 : f32 to vector<200x1xf32>
    %9 = arith.divf %7, %8 : vector<200x1xf32>
    %10 = arith.mulf %4, %4 : vector<200x1xf32>
    %11 = arith.subf %9, %10 : vector<200x1xf32>
    %cst_4 = arith.constant 9.99999974E-6 : f32
    %12 = vector.broadcast %cst_4 : f32 to vector<200x1xf32>
    %13 = arith.addf %11, %12 : vector<200x1xf32>
    %14 = math.rsqrt %13 : vector<200x1xf32>
    %15 = vector.broadcast %4 : vector<200x1xf32> to vector<200x384xf32>
    %16 = arith.subf %0, %15 : vector<200x384xf32>
    %17 = vector.broadcast %14 : vector<200x1xf32> to vector<200x384xf32>
    %18 = arith.mulf %16, %17 : vector<200x384xf32>
    %c0_5 = arith.constant 0 : index
    %c0_6 = arith.constant 0 : index
    %19 = vector.load %arg2[%c0_5, %c0_6] : memref<1x384xf32, #tpu.memory_space<vmem>>, vector<1x384xf32>
    %20 = vector.broadcast %19 : vector<1x384xf32> to vector<200x384xf32>
    %21 = arith.mulf %18, %20 : vector<200x384xf32>
    %c0_7 = arith.constant 0 : index
    %c0_8 = arith.constant 0 : index
    %22 = vector.load %arg3[%c0_7, %c0_8] : memref<1x384xf32, #tpu.memory_space<vmem>>, vector<1x384xf32>
    %23 = vector.broadcast %22 : vector<1x384xf32> to vector<200x384xf32>
    %24 = arith.addf %21, %23 : vector<200x384xf32>
    %c0_9 = arith.constant 0 : index
    %c0_10 = arith.constant 0 : index
    %25 = vector.load %arg4[%c0_9, %c0_10] : memref<384x128xf32, #tpu.memory_space<vmem>>, vector<384x128xf32>
    %cst_11 = arith.constant dense<0.000000e+00> : vector<200x128xf32>
    %26 = tpu.matmul %24, %25, %cst_11 {dimension_numbers = #tpu.dot_dimension_numbers<[1], [0], [0], [1], [0, 0, 1, 1], [], []>} : vector<200x384xf32>, vector<384x128xf32>, vector<200x128xf32> -> vector<200x128xf32>
    %c0_12 = arith.constant 0 : index
    %c0_13 = arith.constant 0 : index
    %27 = vector.load %arg5[%c0_12, %c0_13] : memref<1x128xf32, #tpu.memory_space<vmem>>, vector<1x128xf32>
    %28 = vector.broadcast %27 : vector<1x128xf32> to vector<200x128xf32>
    %29 = arith.addf %26, %28 : vector<200x128xf32>
    %cst_14 = arith.constant 0.000000e+00 : f32
    %30 = vector.broadcast %cst_14 : f32 to vector<200x128xf32>
    %31 = arith.maximumf %29, %30 : vector<200x128xf32>
    %c0_15 = arith.constant 0 : index
    %c0_16 = arith.constant 0 : index
    %32 = vector.load %arg6[%c0_15, %c0_16] : memref<128x128xf32, #tpu.memory_space<vmem>>, vector<128x128xf32>
    %cst_17 = arith.constant dense<0.000000e+00> : vector<200x128xf32>
    %33 = tpu.matmul %31, %32, %cst_17 {dimension_numbers = #tpu.dot_dimension_numbers<[1], [0], [0], [1], [0, 0, 1, 1], [], []>} : vector<200x128xf32>, vector<128x128xf32>, vector<200x128xf32> -> vector<200x128xf32>
    %c0_18 = arith.constant 0 : index
    %c0_19 = arith.constant 0 : index
    %34 = vector.load %arg7[%c0_18, %c0_19] : memref<1x128xf32, #tpu.memory_space<vmem>>, vector<1x128xf32>
    %35 = vector.broadcast %34 : vector<1x128xf32> to vector<200x128xf32>
    %36 = arith.addf %33, %35 : vector<200x128xf32>
    %cst_20 = arith.constant 0.000000e+00 : f32
    %37 = vector.broadcast %cst_20 : f32 to vector<200x128xf32>
    %38 = arith.maximumf %36, %37 : vector<200x128xf32>
    %c0_21 = arith.constant 0 : index
    %c0_22 = arith.constant 0 : index
    %39 = vector.load %arg8[%c0_21, %c0_22] : memref<128x128xf32, #tpu.memory_space<vmem>>, vector<128x128xf32>
    %cst_23 = arith.constant dense<0.000000e+00> : vector<200x128xf32>
    %40 = tpu.matmul %38, %39, %cst_23 {dimension_numbers = #tpu.dot_dimension_numbers<[1], [0], [0], [1], [0, 0, 1, 1], [], []>} : vector<200x128xf32>, vector<128x128xf32>, vector<200x128xf32> -> vector<200x128xf32>
    %c0_24 = arith.constant 0 : index
    %c0_25 = arith.constant 0 : index
    %41 = vector.load %arg9[%c0_24, %c0_25] : memref<1x128xf32, #tpu.memory_space<vmem>>, vector<1x128xf32>
    %42 = vector.broadcast %41 : vector<1x128xf32> to vector<200x128xf32>
    %43 = arith.addf %40, %42 : vector<200x128xf32>
    %c0_26 = arith.constant 0 : index
    %c0_27 = arith.constant 0 : index
    %44 = vector.load %arg10[%c0_26, %c0_27] : memref<200x128xf32, #tpu.memory_space<vmem>>, vector<200x128xf32>
    tpu.vector_store %arg10[%c0_26, %c0_27], %43 {strides = array<i32>} : memref<200x128xf32, #tpu.memory_space<vmem>>, vector<200x128xf32>,
    return
  }
  func.func @transform_0(%arg0: i32) -> (i32, i32) {
    %c0_i32 = arith.constant 0 : i32
    %c0_i32_0 = arith.constant 0 : i32
    return %arg0, %c0_i32 : i32, i32
  }
  func.func @transform_1(%arg0: i32) -> (i32, i32) {
    %c0_i32 = arith.constant 0 : i32
    %c0_i32_0 = arith.constant 0 : i32
    %c0_i32_1 = arith.constant 0 : i32
    return %c0_i32, %c0_i32_0 : i32, i32
  }
  func.func @transform_2(%arg0: i32) -> (i32, i32) {
    %c0_i32 = arith.constant 0 : i32
    %c0_i32_0 = arith.constant 0 : i32
    %c0_i32_1 = arith.constant 0 : i32
    return %c0_i32, %c0_i32_0 : i32, i32
  }
  func.func @transform_3(%arg0: i32) -> (i32, i32) {
    %c0_i32 = arith.constant 0 : i32
    %c0_i32_0 = arith.constant 0 : i32
    %c0_i32_1 = arith.constant 0 : i32
    return %c0_i32, %c0_i32_0 : i32, i32
  }
  func.func @transform_4(%arg0: i32) -> (i32, i32) {
    %c0_i32 = arith.constant 0 : i32
    %c0_i32_0 = arith.constant 0 : i32
    %c0_i32_1 = arith.constant 0 : i32
    return %c0_i32, %c0_i32_0 : i32, i32
  }
  func.func @transform_5(%arg0: i32) -> (i32, i32) {
    %c0_i32 = arith.constant 0 : i32
    %c0_i32_0 = arith.constant 0 : i32
    %c0_i32_1 = arith.constant 0 : i32
    return %c0_i32, %c0_i32_0 : i32, i32
  }
  func.func @transform_6(%arg0: i32) -> (i32, i32) {
    %c0_i32 = arith.constant 0 : i32
    %c0_i32_0 = arith.constant 0 : i32
    %c0_i32_1 = arith.constant 0 : i32
    return %c0_i32, %c0_i32_0 : i32, i32
  }
  func.func @transform_7(%arg0: i32) -> (i32, i32) {
    %c0_i32 = arith.constant 0 : i32
    %c0_i32_0 = arith.constant 0 : i32
    %c0_i32_1 = arith.constant 0 : i32
    return %c0_i32, %c0_i32_0 : i32, i32
  }
  func.func @transform_8(%arg0: i32) -> (i32, i32) {
    %c0_i32 = arith.constant 0 : i32
    %c0_i32_0 = arith.constant 0 : i32
    %c0_i32_1 = arith.constant 0 : i32
    return %c0_i32, %c0_i32_0 : i32, i32
  }
  func.func @transform_9(%arg0: i32) -> (i32, i32) {
    %c0_i32 = arith.constant 0 : i32
    %c0_i32_0 = arith.constant 0 : i32
    return %arg0, %c0_i32 : i32, i32
  }
}

</mosaic_0001>

<llo_original>
// kernel: tpu_custom_call.1
$region0: #{tpu_custom_call.1}
  #allocation0 [shape = 'u32[]', space=smem, size = 0x4, offset = 0x4, fixed_abs, tag = 'smem constant byte address 0x4 - core index']
  #allocation1 [shape = 'u32[144,128]{1,0:T(1,128)}', space=vmem, size = 0x12000, scoped, tag = 'internal scratch']
  %s0 = inlined_call_operand.hbm [shape: f32[200,384], index: 0, kind: input, shape index: {}]
  %s1 = inlined_call_operand.hbm [shape: f32[1,384], index: 1, kind: input, shape index: {}]
  %s2 = inlined_call_operand.vmem [shape: f32[1,384], index: 2, kind: input, shape index: {}]
  %s3 = inlined_call_operand.hbm [shape: f32[384,128], index: 3, kind: input, shape index: {}]
  %s4 = inlined_call_operand.vmem [shape: f32[1,128], index: 4, kind: input, shape index: {}]
  %s5 = inlined_call_operand.hbm [shape: f32[128,128], index: 5, kind: input, shape index: {}]
  %s6 = inlined_call_operand.vmem [shape: f32[1,128], index: 6, kind: input, shape index: {}]
  %s7 = inlined_call_operand.hbm [shape: f32[128,128], index: 7, kind: input, shape index: {}]
  %s8 = inlined_call_operand.vmem [shape: f32[1,128], index: 8, kind: input, shape index: {}]
  %s9 = inlined_call_operand.hbm [shape: f32[200,128], index: 9, kind: output, shape index: {}]
  %s10 = sld [smem:[#allocation0]]
  $region66: #{tpu_custom_call.1} parent=0
    _
  %s12 = ssub.s32 1, %s10
  %s13 = scalar_select 0, %s12, %s10
  $region1: #{tpu_custom_call.1} parent=0
    #allocation2 [shape = 'u8[307200]{0}', space=vmem, size = 0x4b000, scoped, tag = 'input window, operand 0, single buffered']
    #allocation3 [shape = 's32[1]{0}', space=sflag, size = 0x4, scoped, tag = 'scoped memory for tpu_custom_call.1']
    #allocation4 [shape = 's32[1]{0}', space=sflag, size = 0x4, scoped, tag = 'scoped memory for tpu_custom_call.1']
    #allocation5 [shape = 'u8[1536]{0}', space=vmem, size = 0x800, scoped, tag = 'input window, operand 1, single buffered']
    #allocation6 [shape = 's32[1]{0}', space=sflag, size = 0x4, scoped, tag = 'scoped memory for tpu_custom_call.1']
    #allocation7 [shape = 'u8[196608]{0}', space=vmem, size = 0x30000, scoped, tag = 'input window, operand 3, single buffered']
    #allocation8 [shape = 'u8[65536]{0}', space=vmem, size = 0x10000, scoped, tag = 'input window, operand 5, single buffered']
    #allocation9 [shape = 's32[1]{0}', space=sflag, size = 0x4, scoped, tag = 'scoped memory for tpu_custom_call.1']
    #allocation10 [shape = 'u8[65536]{0}', space=vmem, size = 0x10000, scoped, tag = 'input window, operand 7, single buffered']
    #allocation11 [shape = 'u8[102400]{0}', space=vmem, size = 0x19000, scoped, tag = 'output window, operand 0, single buffered']
    %14 = vsyncpa [#allocation3], 0
    %15 = vsyncpa [#allocation6], 0
    %16 = vsyncpa [#allocation9], 0
    %17 = vsyncpa [#allocation4], 0
    // Predicated region
    $region2: #{tpu_custom_call.1} parent=1 // pred_check
      _
    $region3: #{tpu_custom_call.1} parent=1 // pred_check_branch
      %19 = sbr.rel (0) target = $region5
    $region4: #{tpu_custom_call.1} parent=1 // pred_region
      %s21 = ssub.s32 9600, 9600
      %22 = vsyncadd [#allocation3], %s21
      %s23 = sshll.u32 [#allocation2], 4
      %s24 = int_to_ptr.vmem [resolvable:$true] %s23
      %29 = dma.hbm_to_vmem [thread:$0]  %s0, 9600, %s24, [#allocation3], 384, 384, 24
    $region5: #{tpu_custom_call.1} parent=1 // pred_fallthru
      _
    // Predicated region
    $region6: #{tpu_custom_call.1} parent=1 // pred_check
      _
    $region7: #{tpu_custom_call.1} parent=1 // pred_check_branch
      %31 = sbr.rel (0) target = $region9
    $region8: #{tpu_custom_call.1} parent=1 // pred_region
      %s33 = ssub.s32 48, 48
      %34 = vsyncadd [#allocation6], %s33
      %s36 = sshll.u32 [#allocation5], 4
      %s37 = int_to_ptr.vmem [resolvable:$true] %s36
      %39 = dma.hbm_to_vmem [thread:$0]  %s1, 48, %s37, [#allocation6]
    $region9: #{tpu_custom_call.1} parent=1 // pred_fallthru
      _
    // Predicated region
    $region10: #{tpu_custom_call.1} parent=1 // pred_check
      _
    $region11: #{tpu_custom_call.1} parent=1 // pred_check_branch
      %41 = sbr.rel (0) target = $region13
    $region12: #{tpu_custom_call.1} parent=1 // pred_region
      _
    $region13: #{tpu_custom_call.1} parent=1 // pred_fallthru
      _
    // Predicated region
    $region14: #{tpu_custom_call.1} parent=1 // pred_check
      _
    $region15: #{tpu_custom_call.1} parent=1 // pred_check_branch
      %43 = sbr.rel (0) target = $region17
    $region16: #{tpu_custom_call.1} parent=1 // pred_region
      %s45 = ssub.s32 6144, 6144
      %46 = vsyncadd [#allocation6], %s45
      %s47 = sshll.u32 [#allocation7], 4
      %s48 = int_to_ptr.vmem [resolvable:$true] %s47
      %53 = dma.hbm_to_vmem [thread:$0]  %s3, 6144, %s48, [#allocation6], 128, 128, 8
    $region17: #{tpu_custom_call.1} parent=1 // pred_fallthru
      _
    // Predicated region
    $region18: #{tpu_custom_call.1} parent=1 // pred_check
      _
    $region19: #{tpu_custom_call.1} parent=1 // pred_check_branch
      %55 = sbr.rel (0) target = $region21
    $region20: #{tpu_custom_call.1} parent=1 // pred_region
      _
    $region21: #{tpu_custom_call.1} parent=1 // pred_fallthru
      _
    // Predicated region
    $region22: #{tpu_custom_call.1} parent=1 // pred_check
      _
    $region23: #{tpu_custom_call.1} parent=1 // pred_check_branch
      %57 = sbr.rel (0) target = $region25
    $region24: #{tpu_custom_call.1} parent=1 // pred_region
      %s59 = ssub.s32 2048, 2048
      %60 = vsyncadd [#allocation9], %s59
      %s61 = sshll.u32 [#allocation8], 4
      %s62 = int_to_ptr.vmem [resolvable:$true] %s61
      %67 = dma.hbm_to_vmem [thread:$0]  %s5, 2048, %s62, [#allocation9], 128, 128, 8
    $region25: #{tpu_custom_call.1} parent=1 // pred_fallthru
      _
    // Predicated region
    $region26: #{tpu_custom_call.1} parent=1 // pred_check
      _
    $region27: #{tpu_custom_call.1} parent=1 // pred_check_branch
      %69 = sbr.rel (0) target = $region29
    $region28: #{tpu_custom_call.1} parent=1 // pred_region
      _
    $region29: #{tpu_custom_call.1} parent=1 // pred_fallthru
      _
    // Predicated region
    $region30: #{tpu_custom_call.1} parent=1 // pred_check
      _
    $region31: #{tpu_custom_call.1} parent=1 // pred_check_branch
      %71 = sbr.rel (0) target = $region33
    $region32: #{tpu_custom_call.1} parent=1 // pred_region
      %s73 = ssub.s32 2048, 2048
      %74 = vsyncadd [#allocation9], %s73
      %s75 = sshll.u32 [#allocation10], 4
      %s76 = int_to_ptr.vmem [resolvable:$true] %s75
      %81 = dma.hbm_to_vmem [thread:$0]  %s7, 2048, %s76, [#allocation9], 128, 128, 8
    $region33: #{tpu_custom_call.1} parent=1 // pred_fallthru
      _
    // Predicated region
    $region34: #{tpu_custom_call.1} parent=1 // pred_check
      _
    $region35: #{tpu_custom_call.1} parent=1 // pred_check_branch
      %83 = sbr.rel (0) target = $region37
    $region36: #{tpu_custom_call.1} parent=1 // pred_region
      _
    $region37: #{tpu_custom_call.1} parent=1 // pred_fallthru
      _
    // Predicated region
    $region38: #{tpu_custom_call.1} parent=1 // pred_check
      _
    $region39: #{tpu_custom_call.1} parent=1 // pred_check_branch
      %85 = sbr.rel (0) target = $region41
    $region40: #{tpu_custom_call.1} parent=1 // pred_region
      %86 = dma.done [#allocation3], 9600
    $region41: #{tpu_custom_call.1} parent=1 // pred_fallthru
      _
    // Predicated region
    $region42: #{tpu_custom_call.1} parent=1 // pred_check
      _
    $region43: #{tpu_custom_call.1} parent=1 // pred_check_branch
      %88 = sbr.rel (0) target = $region45
    $region44: #{tpu_custom_call.1} parent=1 // pred_region
      %89 = dma.done [#allocation6], 48
    $region45: #{tpu_custom_call.1} parent=1 // pred_fallthru
      _
    // Predicated region
    $region46: #{tpu_custom_call.1} parent=1 // pred_check
      _
    $region47: #{tpu_custom_call.1} parent=1 // pred_check_branch
      %91 = sbr.rel (0) target = $region49
    $region48: #{tpu_custom_call.1} parent=1 // pred_region
      %92 = dma.done [#allocation6], 6144
    $region49: #{tpu_custom_call.1} parent=1 // pred_fallthru
      _
    // Predicated region
    $region50: #{tpu_custom_call.1} parent=1 // pred_check
      _
    $region51: #{tpu_custom_call.1} parent=1 // pred_check_branch
      %94 = sbr.rel (0) target = $region53
    $region52: #{tpu_custom_call.1} parent=1 // pred_region
      %95 = dma.done [#allocation9], 2048
    $region53: #{tpu_custom_call.1} parent=1 // pred_fallthru
      _
    // Predicated region
    $region54: #{tpu_custom_call.1} parent=1 // pred_check
      _
    $region55: #{tpu_custom_call.1} parent=1 // pred_check_branch
      %97 = sbr.rel (0) target = $region57
    $region56: #{tpu_custom_call.1} parent=1 // pred_region
      %98 = dma.done [#allocation9], 2048
    $region57: #{tpu_custom_call.1} parent=1 // pred_fallthru
      _
    %v99 = vld [vmem:[#allocation2] sm:$0xff]
    %v100 = vld [vmem:[#allocation2 + $0x8] sm:$0xff]
    %v101 = vld [vmem:[#allocation2 + $0x10] sm:$0xff]
    %v102 = vld [vmem:[#allocation2 + $0x18] sm:$0xff]
    %v103 = vld [vmem:[#allocation2 + $0x20] sm:$0xff]
    %v104 = vld [vmem:[#allocation2 + $0x28] sm:$0xff]
    %v105 = vld [vmem:[#allocation2 + $0x30] sm:$0xff]
    %v106 = vld [vmem:[#allocation2 + $0x38] sm:$0xff]
    %v107 = vld [vmem:[#allocation2 + $0x40] sm:$0xff]
    %v108 = vld [vmem:[#allocation2 + $0x48] sm:$0xff]
    %v109 = vld [vmem:[#allocation2 + $0x50] sm:$0xff]
    %v110 = vld [vmem:[#allocation2 + $0x58] sm:$0xff]
    %v111 = vld [vmem:[#allocation2 + $0x60] sm:$0xff]
    %v112 = vld [vmem:[#allocation2 + $0x68] sm:$0xff]
    %v113 = vld [vmem:[#allocation2 + $0x70] sm:$0xff]
    %v114 = vld [vmem:[#allocation2 + $0x78] sm:$0xff]
    %v115 = vld [vmem:[#allocation2 + $0x80] sm:$0xff]
    %v116 = vld [vmem:[#allocation2 + $0x88] sm:$0xff]
    %v117 = vld [vmem:[#allocation2 + $0x90] sm:$0xff]
    %v118 = vld [vmem:[#allocation2 + $0x98] sm:$0xff]
    %v119 = vld [vmem:[#allocation2 + $0xa0] sm:$0xff]
    %v120 = vld [vmem:[#allocation2 + $0xa8] sm:$0xff]
    %v121 = vld [vmem:[#allocation2 + $0xb0] sm:$0xff]
    %v122 = vld [vmem:[#allocation2 + $0xb8] sm:$0xff]
    %v123 = vld [vmem:[#allocation2 + $0xc0] sm:$0xff]
    %v124 = vld [vmem:[#allocation2 + $0xc8] sm:$0xff]
    %v125 = vld [vmem:[#allocation2 + $0xd0] sm:$0xff]
    %v126 = vld [vmem:[#allocation2 + $0xd8] sm:$0xff]
    %v127 = vld [vmem:[#allocation2 + $0xe0] sm:$0xff]
    %v128 = vld [vmem:[#allocation2 + $0xe8] sm:$0xff]
    %v129 = vld [vmem:[#allocation2 + $0xf0] sm:$0xff]
    %v130 = vld [vmem:[#allocation2 + $0xf8] sm:$0xff]
    %v131 = vld [vmem:[#allocation2 + $0x100] sm:$0xff]
    %v132 = vld [vmem:[#allocation2 + $0x108] sm:$0xff]
    %v133 = vld [vmem:[#allocation2 + $0x110] sm:$0xff]
    %v134 = vld [vmem:[#allocation2 + $0x118] sm:$0xff]
    %v135 = vld [vmem:[#allocation2 + $0x120] sm:$0xff]
    %v136 = vld [vmem:[#allocation2 + $0x128] sm:$0xff]
    %v137 = vld [vmem:[#allocation2 + $0x130] sm:$0xff]
    %v138 = vld [vmem:[#allocation2 + $0x138] sm:$0xff]
    %v139 = vld [vmem:[#allocation2 + $0x140] sm:$0xff]
    %v140 = vld [vmem:[#allocation2 + $0x148] sm:$0xff]
    %v141 = vld [vmem:[#allocation2 + $0x150] sm:$0xff]
    %v142 = vld [vmem:[#allocation2 + $0x158] sm:$0xff]
    %v143 = vld [vmem:[#allocation2 + $0x160] sm:$0xff]
    %v144 = vld [vmem:[#allocation2 + $0x168] sm:$0xff]
    %v145 = vld [vmem:[#allocation2 + $0x170] sm:$0xff]
    %v146 = vld [vmem:[#allocation2 + $0x178] sm:$0xff]
    %v147 = vld [vmem:[#allocation2 + $0x180] sm:$0xff]
    %v148 = vld [vmem:[#allocation2 + $0x188] sm:$0xff]
    %v149 = vld [vmem:[#allocation2 + $0x190] sm:$0xff]
    %v150 = vld [vmem:[#allocation2 + $0x198] sm:$0xff]
    %v151 = vld [vmem:[#allocation2 + $0x1a0] sm:$0xff]
    %v152 = vld [vmem:[#allocation2 + $0x1a8] sm:$0xff]
    %v153 = vld [vmem:[#allocation2 + $0x1b0] sm:$0xff]
    %v154 = vld [vmem:[#allocation2 + $0x1b8] sm:$0xff]
    %v155 = vld [vmem:[#allocation2 + $0x1c0] sm:$0xff]
    %v156 = vld [vmem:[#allocation2 + $0x1c8] sm:$0xff]
    %v157 = vld [vmem:[#allocation2 + $0x1d0] sm:$0xff]
    %v158 = vld [vmem:[#allocation2 + $0x1d8] sm:$0xff]
    %v159 = vld [vmem:[#allocation2 + $0x1e0] sm:$0xff]
    %v160 = vld [vmem:[#allocation2 + $0x1e8] sm:$0xff]
    %v161 = vld [vmem:[#allocation2 + $0x1f0] sm:$0xff]
    %v162 = vld [vmem:[#allocation2 + $0x1f8] sm:$0xff]
    %v163 = vld [vmem:[#allocation2 + $0x200] sm:$0xff]
    %v164 = vld [vmem:[#allocation2 + $0x208] sm:$0xff]
    %v165 = vld [vmem:[#allocation2 + $0x210] sm:$0xff]
    %v166 = vld [vmem:[#allocation2 + $0x218] sm:$0xff]
    %v167 = vld [vmem:[#allocation2 + $0x220] sm:$0xff]
    %v168 = vld [vmem:[#allocation2 + $0x228] sm:$0xff]
    %v169 = vld [vmem:[#allocation2 + $0x230] sm:$0xff]
    %v170 = vld [vmem:[#allocation2 + $0x238] sm:$0xff]
    %v171 = vld [vmem:[#allocation2 + $0x240] sm:$0xff]
    %v172 = vld [vmem:[#allocation2 + $0x248] sm:$0xff]
    %v173 = vld [vmem:[#allocation2 + $0x250] sm:$0xff]
    %v174 = vadd.f32 %v99, %v100
    %v175 = vadd.f32 %v174, %v101
    %176 = vadd.xlane.f32.xlu0 %v175
    %v177 = vpop.xlane.xlu0 %176
    %v178 = vadd.f32 %v102, %v103
    %v179 = vadd.f32 %v178, %v104
    %180 = vadd.xlane.f32.xlu0 %v179
    %v181 = vpop.xlane.xlu0 %180
    %v182 = vadd.f32 %v105, %v106
    %v183 = vadd.f32 %v182, %v107
    %184 = vadd.xlane.f32.xlu0 %v183
    %v185 = vpop.xlane.xlu0 %184
    %v186 = vadd.f32 %v108, %v109
    %v187 = vadd.f32 %v186, %v110
    %188 = vadd.xlane.f32.xlu0 %v187
    %v189 = vpop.xlane.xlu0 %188
    %v190 = vadd.f32 %v111, %v112
    %v191 = vadd.f32 %v190, %v113
    %192 = vadd.xlane.f32.xlu0 %v191
    %v193 = vpop.xlane.xlu0 %192
    %v194 = vadd.f32 %v114, %v115
    %v195 = vadd.f32 %v194, %v116
    %196 = vadd.xlane.f32.xlu0 %v195
    %v197 = vpop.xlane.xlu0 %196
    %v198 = vadd.f32 %v117, %v118
    %v199 = vadd.f32 %v198, %v119
    %200 = vadd.xlane.f32.xlu0 %v199
    %v201 = vpop.xlane.xlu0 %200
    %v202 = vadd.f32 %v120, %v121
    %v203 = vadd.f32 %v202, %v122
    %204 = vadd.xlane.f32.xlu0 %v203
    %v205 = vpop.xlane.xlu0 %204
    %v206 = vadd.f32 %v123, %v124
    %v207 = vadd.f32 %v206, %v125
    %208 = vadd.xlane.f32.xlu0 %v207
    %v209 = vpop.xlane.xlu0 %208
    %v210 = vadd.f32 %v126, %v127
    %v211 = vadd.f32 %v210, %v128
    %212 = vadd.xlane.f32.xlu0 %v211
    %v213 = vpop.xlane.xlu0 %212
    %v214 = vadd.f32 %v129, %v130
    %v215 = vadd.f32 %v214, %v131
    %216 = vadd.xlane.f32.xlu0 %v215
    %v217 = vpop.xlane.xlu0 %216
    %v218 = vadd.f32 %v132, %v133
    %v219 = vadd.f32 %v218, %v134
    %220 = vadd.xlane.f32.xlu0 %v219
    %v221 = vpop.xlane.xlu0 %220
    %v222 = vadd.f32 %v135, %v136
    %v223 = vadd.f32 %v222, %v137
    %224 = vadd.xlane.f32.xlu0 %v223
    %v225 = vpop.xlane.xlu0 %224
    %v226 = vadd.f32 %v138, %v139
    %v227 = vadd.f32 %v226, %v140
    %228 = vadd.xlane.f32.xlu0 %v227
    %v229 = vpop.xlane.xlu0 %228
    %v230 = vadd.f32 %v141, %v142
    %v231 = vadd.f32 %v230, %v143
    %232 = vadd.xlane.f32.xlu0 %v231
    %v233 = vpop.xlane.xlu0 %232
    %v234 = vadd.f32 %v144, %v145
    %v235 = vadd.f32 %v234, %v146
    %236 = vadd.xlane.f32.xlu0 %v235
    %v237 = vpop.xlane.xlu0 %236
    %v238 = vadd.f32 %v147, %v148
    %v239 = vadd.f32 %v238, %v149
    %240 = vadd.xlane.f32.xlu0 %v239
    %v241 = vpop.xlane.xlu0 %240
    %v242 = vadd.f32 %v150, %v151
    %v243 = vadd.f32 %v242, %v152
    %244 = vadd.xlane.f32.xlu0 %v243
    %v245 = vpop.xlane.xlu0 %244
    %v246 = vadd.f32 %v153, %v154
    %v247 = vadd.f32 %v246, %v155
    %248 = vadd.xlane.f32.xlu0 %v247
    %v249 = vpop.xlane.xlu0 %248
    %v250 = vadd.f32 %v156, %v157
    %v251 = vadd.f32 %v250, %v158
    %252 = vadd.xlane.f32.xlu0 %v251
    %v253 = vpop.xlane.xlu0 %252
    %v254 = vadd.f32 %v159, %v160
    %v255 = vadd.f32 %v254, %v161
    %256 = vadd.xlane.f32.xlu0 %v255
    %v257 = vpop.xlane.xlu0 %256
    %v258 = vadd.f32 %v162, %v163
    %v259 = vadd.f32 %v258, %v164
    %260 = vadd.xlane.f32.xlu0 %v259
    %v261 = vpop.xlane.xlu0 %260
    %v262 = vadd.f32 %v165, %v166
    %v263 = vadd.f32 %v262, %v167
    %264 = vadd.xlane.f32.xlu0 %v263
    %v265 = vpop.xlane.xlu0 %264
    %v266 = vadd.f32 %v168, %v169
    %v267 = vadd.f32 %v266, %v170
    %268 = vadd.xlane.f32.xlu0 %v267
    %v269 = vpop.xlane.xlu0 %268
    %v270 = vadd.f32 %v171, %v172
    %v271 = vadd.f32 %v270, %v173
    %272 = vadd.xlane.f32.xlu0 %v271
    %v273 = vpop.xlane.xlu0 %272
    %v274 = vrcp.pop 384.0
    %v275 = vmul.f32 %v177, %v274
    %v276 = vmul.f32 %v181, %v274
    %v277 = vmul.f32 %v185, %v274
    %v278 = vmul.f32 %v189, %v274
    %v279 = vmul.f32 %v193, %v274
    %v280 = vmul.f32 %v197, %v274
    %v281 = vmul.f32 %v201, %v274
    %v282 = vmul.f32 %v205, %v274
    %v283 = vmul.f32 %v209, %v274
    %v284 = vmul.f32 %v213, %v274
    %v285 = vmul.f32 %v217, %v274
    %v286 = vmul.f32 %v221, %v274
    %v287 = vmul.f32 %v225, %v274
    %v288 = vmul.f32 %v229, %v274
    %v289 = vmul.f32 %v233, %v274
    %v290 = vmul.f32 %v237, %v274
    %v291 = vmul.f32 %v241, %v274
    %v292 = vmul.f32 %v245, %v274
    %v293 = vmul.f32 %v249, %v274
    %v294 = vmul.f32 %v253, %v274
    %v295 = vmul.f32 %v257, %v274
    %v296 = vmul.f32 %v261, %v274
    %v297 = vmul.f32 %v265, %v274
    %v298 = vmul.f32 %v269, %v274
    %v299 = vmul.f32 %v273, %v274
    %v300 = vmul.f32 %v99, %v99
    %v301 = vmul.f32 %v100, %v100
    %v302 = vmul.f32 %v101, %v101
    %v303 = vmul.f32 %v102, %v102
    %v304 = vmul.f32 %v103, %v103
    %v305 = vmul.f32 %v104, %v104
    %v306 = vmul.f32 %v105, %v105
    %v307 = vmul.f32 %v106, %v106
    %v308 = vmul.f32 %v107, %v107
    %v309 = vmul.f32 %v108, %v108
    %v310 = vmul.f32 %v109, %v109
    %v311 = vmul.f32 %v110, %v110
    %v312 = vmul.f32 %v111, %v111
    %v313 = vmul.f32 %v112, %v112
    %v314 = vmul.f32 %v113, %v113
    %v315 = vmul.f32 %v114, %v114
    %v316 = vmul.f32 %v115, %v115
    %v317 = vmul.f32 %v116, %v116
    %v318 = vmul.f32 %v117, %v117
    %v319 = vmul.f32 %v118, %v118
    %v320 = vmul.f32 %v119, %v119
    %v321 = vmul.f32 %v120, %v120
    %v322 = vmul.f32 %v121, %v121
    %v323 = vmul.f32 %v122, %v122
    %v324 = vmul.f32 %v123, %v123
    %v325 = vmul.f32 %v124, %v124
    %v326 = vmul.f32 %v125, %v125
    %v327 = vmul.f32 %v126, %v126
    %v328 = vmul.f32 %v127, %v127
    %v329 = vmul.f32 %v128, %v128
    %v330 = vmul.f32 %v129, %v129
    %v331 = vmul.f32 %v130, %v130
    %v332 = vmul.f32 %v131, %v131
    %v333 = vmul.f32 %v132, %v132
    %v334 = vmul.f32 %v133, %v133
    %v335 = vmul.f32 %v134, %v134
    %v336 = vmul.f32 %v135, %v135
    %v337 = vmul.f32 %v136, %v136
    %v338 = vmul.f32 %v137, %v137
    %v339 = vmul.f32 %v138, %v138
    %v340 = vmul.f32 %v139, %v139
    %v341 = vmul.f32 %v140, %v140
    %v342 = vmul.f32 %v141, %v141
    %v343 = vmul.f32 %v142, %v142
    %v344 = vmul.f32 %v143, %v143
    %v345 = vmul.f32 %v144, %v144
    %v346 = vmul.f32 %v145, %v145
    %v347 = vmul.f32 %v146, %v146
    %v348 = vmul.f32 %v147, %v147
    %v349 = vmul.f32 %v148, %v148
    %v350 = vmul.f32 %v149, %v149
    %v351 = vmul.f32 %v150, %v150
    %v352 = vmul.f32 %v151, %v151
    %v353 = vmul.f32 %v152, %v152
    %v354 = vmul.f32 %v153, %v153
    %v355 = vmul.f32 %v154, %v154
    %v356 = vmul.f32 %v155, %v155
    %v357 = vmul.f32 %v156, %v156
    %v358 = vmul.f32 %v157, %v157
    %v359 = vmul.f32 %v158, %v158
    %v360 = vmul.f32 %v159, %v159
    %v361 = vmul.f32 %v160, %v160
    %v362 = vmul.f32 %v161, %v161
    %v363 = vmul.f32 %v162, %v162
    %v364 = vmul.f32 %v163, %v163
    %v365 = vmul.f32 %v164, %v164
    %v366 = vmul.f32 %v165, %v165
    %v367 = vmul.f32 %v166, %v166
    %v368 = vmul.f32 %v167, %v167
    %v369 = vmul.f32 %v168, %v168
    %v370 = vmul.f32 %v169, %v169
    %v371 = vmul.f32 %v170, %v170
    %v372 = vmul.f32 %v171, %v171
    %v373 = vmul.f32 %v172, %v172
    %v374 = vmul.f32 %v173, %v173
    %v375 = vadd.f32 %v300, %v301
    %v376 = vadd.f32 %v375, %v302
    %377 = vadd.xlane.f32.xlu0 %v376
    %v378 = vpop.xlane.xlu0 %377
    %v379 = vadd.f32 %v303, %v304
    %v380 = vadd.f32 %v379, %v305
    %381 = vadd.xlane.f32.xlu0 %v380
    %v382 = vpop.xlane.xlu0 %381
    %v383 = vadd.f32 %v306, %v307
    %v384 = vadd.f32 %v383, %v308
    %385 = vadd.xlane.f32.xlu0 %v384
    %v386 = vpop.xlane.xlu0 %385
    %v387 = vadd.f32 %v309, %v310
    %v388 = vadd.f32 %v387, %v311
    %389 = vadd.xlane.f32.xlu0 %v388
    %v390 = vpop.xlane.xlu0 %389
    %v391 = vadd.f32 %v312, %v313
    %v392 = vadd.f32 %v391, %v314
    %393 = vadd.xlane.f32.xlu0 %v392
    %v394 = vpop.xlane.xlu0 %393
    %v395 = vadd.f32 %v315, %v316
    %v396 = vadd.f32 %v395, %v317
    %397 = vadd.xlane.f32.xlu0 %v396
    %v398 = vpop.xlane.xlu0 %397
    %v399 = vadd.f32 %v318, %v319
    %v400 = vadd.f32 %v399, %v320
    %401 = vadd.xlane.f32.xlu0 %v400
    %v402 = vpop.xlane.xlu0 %401
    %v403 = vadd.f32 %v321, %v322
    %v404 = vadd.f32 %v403, %v323
    %405 = vadd.xlane.f32.xlu0 %v404
    %v406 = vpop.xlane.xlu0 %405
    %v407 = vadd.f32 %v324, %v325
    %v408 = vadd.f32 %v407, %v326
    %409 = vadd.xlane.f32.xlu0 %v408
    %v410 = vpop.xlane.xlu0 %409
    %v411 = vadd.f32 %v327, %v328
    %v412 = vadd.f32 %v411, %v329
    %413 = vadd.xlane.f32.xlu0 %v412
    %v414 = vpop.xlane.xlu0 %413
    %v415 = vadd.f32 %v330, %v331
    %v416 = vadd.f32 %v415, %v332
    %417 = vadd.xlane.f32.xlu0 %v416
    %v418 = vpop.xlane.xlu0 %417
    %v419 = vadd.f32 %v333, %v334
    %v420 = vadd.f32 %v419, %v335
    %421 = vadd.xlane.f32.xlu0 %v420
    %v422 = vpop.xlane.xlu0 %421
    %v423 = vadd.f32 %v336, %v337
    %v424 = vadd.f32 %v423, %v338
    %425 = vadd.xlane.f32.xlu0 %v424
    %v426 = vpop.xlane.xlu0 %425
    %v427 = vadd.f32 %v339, %v340
    %v428 = vadd.f32 %v427, %v341
    %429 = vadd.xlane.f32.xlu0 %v428
    %v430 = vpop.xlane.xlu0 %429
    %v431 = vadd.f32 %v342, %v343
    %v432 = vadd.f32 %v431, %v344
    %433 = vadd.xlane.f32.xlu0 %v432
    %v434 = vpop.xlane.xlu0 %433
    %v435 = vadd.f32 %v345, %v346
    %v436 = vadd.f32 %v435, %v347
    %437 = vadd.xlane.f32.xlu0 %v436
    %v438 = vpop.xlane.xlu0 %437
    %v439 = vadd.f32 %v348, %v349
    %v440 = vadd.f32 %v439, %v350
    %441 = vadd.xlane.f32.xlu0 %v440
    %v442 = vpop.xlane.xlu0 %441
    %v443 = vadd.f32 %v351, %v352
    %v444 = vadd.f32 %v443, %v353
    %445 = vadd.xlane.f32.xlu0 %v444
    %v446 = vpop.xlane.xlu0 %445
    %v447 = vadd.f32 %v354, %v355
    %v448 = vadd.f32 %v447, %v356
    %449 = vadd.xlane.f32.xlu0 %v448
    %v450 = vpop.xlane.xlu0 %449
    %v451 = vadd.f32 %v357, %v358
    %v452 = vadd.f32 %v451, %v359
    %453 = vadd.xlane.f32.xlu0 %v452
    %v454 = vpop.xlane.xlu0 %453
    %v455 = vadd.f32 %v360, %v361
    %v456 = vadd.f32 %v455, %v362
    %457 = vadd.xlane.f32.xlu0 %v456
    %v458 = vpop.xlane.xlu0 %457
    %v459 = vadd.f32 %v363, %v364
    %v460 = vadd.f32 %v459, %v365
    %461 = vadd.xlane.f32.xlu0 %v460
    %v462 = vpop.xlane.xlu0 %461
    %v463 = vadd.f32 %v366, %v367
    %v464 = vadd.f32 %v463, %v368
    %465 = vadd.xlane.f32.xlu0 %v464
    %v466 = vpop.xlane.xlu0 %465
    %v467 = vadd.f32 %v369, %v370
    %v468 = vadd.f32 %v467, %v371
    %469 = vadd.xlane.f32.xlu0 %v468
    %v470 = vpop.xlane.xlu0 %469
    %v471 = vadd.f32 %v372, %v373
    %v472 = vadd.f32 %v471, %v374
    %473 = vadd.xlane.f32.xlu0 %v472
    %v474 = vpop.xlane.xlu0 %473
    %v475 = vmul.f32 %v378, %v274
    %v476 = vmul.f32 %v382, %v274
    %v477 = vmul.f32 %v386, %v274
    %v478 = vmul.f32 %v390, %v274
    %v479 = vmul.f32 %v394, %v274
    %v480 = vmul.f32 %v398, %v274
    %v481 = vmul.f32 %v402, %v274
    %v482 = vmul.f32 %v406, %v274
    %v483 = vmul.f32 %v410, %v274
    %v484 = vmul.f32 %v414, %v274
    %v485 = vmul.f32 %v418, %v274
    %v486 = vmul.f32 %v422, %v274
    %v487 = vmul.f32 %v426, %v274
    %v488 = vmul.f32 %v430, %v274
    %v489 = vmul.f32 %v434, %v274
    %v490 = vmul.f32 %v438, %v274
    %v491 = vmul.f32 %v442, %v274
    %v492 = vmul.f32 %v446, %v274
    %v493 = vmul.f32 %v450, %v274
    %v494 = vmul.f32 %v454, %v274
    %v495 = vmul.f32 %v458, %v274
    %v496 = vmul.f32 %v462, %v274
    %v497 = vmul.f32 %v466, %v274
    %v498 = vmul.f32 %v470, %v274
    %v499 = vmul.f32 %v474, %v274
    %v500 = vmul.f32 %v275, %v275
    %v501 = vmul.f32 %v276, %v276
    %v502 = vmul.f32 %v277, %v277
    %v503 = vmul.f32 %v278, %v278
    %v504 = vmul.f32 %v279, %v279
    %v505 = vmul.f32 %v280, %v280
    %v506 = vmul.f32 %v281, %v281
    %v507 = vmul.f32 %v282, %v282
    %v508 = vmul.f32 %v283, %v283
    %v509 = vmul.f32 %v284, %v284
    %v510 = vmul.f32 %v285, %v285
    %v511 = vmul.f32 %v286, %v286
    %v512 = vmul.f32 %v287, %v287
    %v513 = vmul.f32 %v288, %v288
    %v514 = vmul.f32 %v289, %v289
    %v515 = vmul.f32 %v290, %v290
    %v516 = vmul.f32 %v291, %v291
    %v517 = vmul.f32 %v292, %v292
    %v518 = vmul.f32 %v293, %v293
    %v519 = vmul.f32 %v294, %v294
    %v520 = vmul.f32 %v295, %v295
    %v521 = vmul.f32 %v296, %v296
    %v522 = vmul.f32 %v297, %v297
    %v523 = vmul.f32 %v298, %v298
    %v524 = vmul.f32 %v299, %v299
    %v525 = vsub.f32 %v475, %v500
    %v526 = vsub.f32 %v476, %v501
    %v527 = vsub.f32 %v477, %v502
    %v528 = vsub.f32 %v478, %v503
    %v529 = vsub.f32 %v479, %v504
    %v530 = vsub.f32 %v480, %v505
    %v531 = vsub.f32 %v481, %v506
    %v532 = vsub.f32 %v482, %v507
    %v533 = vsub.f32 %v483, %v508
    %v534 = vsub.f32 %v484, %v509
    %v535 = vsub.f32 %v485, %v510
    %v536 = vsub.f32 %v486, %v511
    %v537 = vsub.f32 %v487, %v512
    %v538 = vsub.f32 %v488, %v513
    %v539 = vsub.f32 %v489, %v514
    %v540 = vsub.f32 %v490, %v515
    %v541 = vsub.f32 %v491, %v516
    %v542 = vsub.f32 %v492, %v517
    %v543 = vsub.f32 %v493, %v518
    %v544 = vsub.f32 %v494, %v519
    %v545 = vsub.f32 %v495, %v520
    %v546 = vsub.f32 %v496, %v521
    %v547 = vsub.f32 %v497, %v522
    %v548 = vsub.f32 %v498, %v523
    %v549 = vsub.f32 %v499, %v524
    %v550 = vadd.f32 %v525, 1e-05
    %v551 = vadd.f32 %v526, 1e-05
    %v552 = vadd.f32 %v527, 1e-05
    %v553 = vadd.f32 %v528, 1e-05
    %v554 = vadd.f32 %v529, 1e-05
    %v555 = vadd.f32 %v530, 1e-05
    %v556 = vadd.f32 %v531, 1e-05
    %v557 = vadd.f32 %v532, 1e-05
    %v558 = vadd.f32 %v533, 1e-05
    %v559 = vadd.f32 %v534, 1e-05
    %v560 = vadd.f32 %v535, 1e-05
    %v561 = vadd.f32 %v536, 1e-05
    %v562 = vadd.f32 %v537, 1e-05
    %v563 = vadd.f32 %v538, 1e-05
    %v564 = vadd.f32 %v539, 1e-05
    %v565 = vadd.f32 %v540, 1e-05
    %v566 = vadd.f32 %v541, 1e-05
    %v567 = vadd.f32 %v542, 1e-05
    %v568 = vadd.f32 %v543, 1e-05
    %v569 = vadd.f32 %v544, 1e-05
    %v570 = vadd.f32 %v545, 1e-05
    %v571 = vadd.f32 %v546, 1e-05
    %v572 = vadd.f32 %v547, 1e-05
    %v573 = vadd.f32 %v548, 1e-05
    %v574 = vadd.f32 %v549, 1e-05
    %v575 = vrsqrt.pop %v550
    %v576 = vrsqrt.pop %v551
    %v577 = vrsqrt.pop %v552
    %v578 = vrsqrt.pop %v553
    %v579 = vrsqrt.pop %v554
    %v580 = vrsqrt.pop %v555
    %v581 = vrsqrt.pop %v556
    %v582 = vrsqrt.pop %v557
    %v583 = vrsqrt.pop %v558
    %v584 = vrsqrt.pop %v559
    %v585 = vrsqrt.pop %v560
    %v586 = vrsqrt.pop %v561
    %v587 = vrsqrt.pop %v562
    %v588 = vrsqrt.pop %v563
    %v589 = vrsqrt.pop %v564
    %v590 = vrsqrt.pop %v565
    %v591 = vrsqrt.pop %v566
    %v592 = vrsqrt.pop %v567
    %v593 = vrsqrt.pop %v568
    %v594 = vrsqrt.pop %v569
    %v595 = vrsqrt.pop %v570
    %v596 = vrsqrt.pop %v571
    %v597 = vrsqrt.pop %v572
    %v598 = vrsqrt.pop %v573
    %v599 = vrsqrt.pop %v574
    %v600 = vsub.f32 %v99, %v275
    %v601 = vsub.f32 %v100, %v275
    %v602 = vsub.f32 %v101, %v275
    %v603 = vsub.f32 %v102, %v276
    %v604 = vsub.f32 %v103, %v276
    %v605 = vsub.f32 %v104, %v276
    %v606 = vsub.f32 %v105, %v277
    %v607 = vsub.f32 %v106, %v277
    %v608 = vsub.f32 %v107, %v277
    %v609 = vsub.f32 %v108, %v278
    %v610 = vsub.f32 %v109, %v278
    %v611 = vsub.f32 %v110, %v278
    %v612 = vsub.f32 %v111, %v279
    %v613 = vsub.f32 %v112, %v279
    %v614 = vsub.f32 %v113, %v279
    %v615 = vsub.f32 %v114, %v280
    %v616 = vsub.f32 %v115, %v280
    %v617 = vsub.f32 %v116, %v280
    %v618 = vsub.f32 %v117, %v281
    %v619 = vsub.f32 %v118, %v281
    %v620 = vsub.f32 %v119, %v281
    %v621 = vsub.f32 %v120, %v282
    %v622 = vsub.f32 %v121, %v282
    %v623 = vsub.f32 %v122, %v282
    %v624 = vsub.f32 %v123, %v283
    %v625 = vsub.f32 %v124, %v283
    %v626 = vsub.f32 %v125, %v283
    %v627 = vsub.f32 %v126, %v284
    %v628 = vsub.f32 %v127, %v284
    %v629 = vsub.f32 %v128, %v284
    %v630 = vsub.f32 %v129, %v285
    %v631 = vsub.f32 %v130, %v285
    %v632 = vsub.f32 %v131, %v285
    %v633 = vsub.f32 %v132, %v286
    %v634 = vsub.f32 %v133, %v286
    %v635 = vsub.f32 %v134, %v286
    %v636 = vsub.f32 %v135, %v287
    %v637 = vsub.f32 %v136, %v287
    %v638 = vsub.f32 %v137, %v287
    %v639 = vsub.f32 %v138, %v288
    %v640 = vsub.f32 %v139, %v288
    %v641 = vsub.f32 %v140, %v288
    %v642 = vsub.f32 %v141, %v289
    %v643 = vsub.f32 %v142, %v289
    %v644 = vsub.f32 %v143, %v289
    %v645 = vsub.f32 %v144, %v290
    %v646 = vsub.f32 %v145, %v290
    %v647 = vsub.f32 %v146, %v290
    %v648 = vsub.f32 %v147, %v291
    %v649 = vsub.f32 %v148, %v291
    %v650 = vsub.f32 %v149, %v291
    %v651 = vsub.f32 %v150, %v292
    %v652 = vsub.f32 %v151, %v292
    %v653 = vsub.f32 %v152, %v292
    %v654 = vsub.f32 %v153, %v293
    %v655 = vsub.f32 %v154, %v293
    %v656 = vsub.f32 %v155, %v293
    %v657 = vsub.f32 %v156, %v294
    %v658 = vsub.f32 %v157, %v294
    %v659 = vsub.f32 %v158, %v294
    %v660 = vsub.f32 %v159, %v295
    %v661 = vsub.f32 %v160, %v295
    %v662 = vsub.f32 %v161, %v295
    %v663 = vsub.f32 %v162, %v296
    %v664 = vsub.f32 %v163, %v296
    %v665 = vsub.f32 %v164, %v296
    %v666 = vsub.f32 %v165, %v297
    %v667 = vsub.f32 %v166, %v297
    %v668 = vsub.f32 %v167, %v297
    %v669 = vsub.f32 %v168, %v298
    %v670 = vsub.f32 %v169, %v298
    %v671 = vsub.f32 %v170, %v298
    %v672 = vsub.f32 %v171, %v299
    %v673 = vsub.f32 %v172, %v299
    %v674 = vsub.f32 %v173, %v299
    %v675 = vmul.f32 %v600, %v575
    %v676 = vmul.f32 %v601, %v575
    %v677 = vmul.f32 %v602, %v575
    %v678 = vmul.f32 %v603, %v576
    %v679 = vmul.f32 %v604, %v576
    %v680 = vmul.f32 %v605, %v576
    %v681 = vmul.f32 %v606, %v577
    %v682 = vmul.f32 %v607, %v577
    %v683 = vmul.f32 %v608, %v577
    %v684 = vmul.f32 %v609, %v578
    %v685 = vmul.f32 %v610, %v578
    %v686 = vmul.f32 %v611, %v578
    %v687 = vmul.f32 %v612, %v579
    %v688 = vmul.f32 %v613, %v579
    %v689 = vmul.f32 %v614, %v579
    %v690 = vmul.f32 %v615, %v580
    %v691 = vmul.f32 %v616, %v580
    %v692 = vmul.f32 %v617, %v580
    %v693 = vmul.f32 %v618, %v581
    %v694 = vmul.f32 %v619, %v581
    %v695 = vmul.f32 %v620, %v581
    %v696 = vmul.f32 %v621, %v582
    %v697 = vmul.f32 %v622, %v582
    %v698 = vmul.f32 %v623, %v582
    %v699 = vmul.f32 %v624, %v583
    %v700 = vmul.f32 %v625, %v583
    %v701 = vmul.f32 %v626, %v583
    %v702 = vmul.f32 %v627, %v584
    %v703 = vmul.f32 %v628, %v584
    %v704 = vmul.f32 %v629, %v584
    %v705 = vmul.f32 %v630, %v585
    %v706 = vmul.f32 %v631, %v585
    %v707 = vmul.f32 %v632, %v585
    %v708 = vmul.f32 %v633, %v586
    %v709 = vmul.f32 %v634, %v586
    %v710 = vmul.f32 %v635, %v586
    %v711 = vmul.f32 %v636, %v587
    %v712 = vmul.f32 %v637, %v587
    %v713 = vmul.f32 %v638, %v587
    %v714 = vmul.f32 %v639, %v588
    %v715 = vmul.f32 %v640, %v588
    %v716 = vmul.f32 %v641, %v588
    %v717 = vmul.f32 %v642, %v589
    %v718 = vmul.f32 %v643, %v589
    %v719 = vmul.f32 %v644, %v589
    %v720 = vmul.f32 %v645, %v590
    %v721 = vmul.f32 %v646, %v590
    %v722 = vmul.f32 %v647, %v590
    %v723 = vmul.f32 %v648, %v591
    %v724 = vmul.f32 %v649, %v591
    %v725 = vmul.f32 %v650, %v591
    %v726 = vmul.f32 %v651, %v592
    %v727 = vmul.f32 %v652, %v592
    %v728 = vmul.f32 %v653, %v592
    %v729 = vmul.f32 %v654, %v593
    %v730 = vmul.f32 %v655, %v593
    %v731 = vmul.f32 %v656, %v593
    %v732 = vmul.f32 %v657, %v594
    %v733 = vmul.f32 %v658, %v594
    %v734 = vmul.f32 %v659, %v594
    %v735 = vmul.f32 %v660, %v595
    %v736 = vmul.f32 %v661, %v595
    %v737 = vmul.f32 %v662, %v595
    %v738 = vmul.f32 %v663, %v596
    %v739 = vmul.f32 %v664, %v596
    %v740 = vmul.f32 %v665, %v596
    %v741 = vmul.f32 %v666, %v597
    %v742 = vmul.f32 %v667, %v597
    %v743 = vmul.f32 %v668, %v597
    %v744 = vmul.f32 %v669, %v598
    %v745 = vmul.f32 %v670, %v598
    %v746 = vmul.f32 %v671, %v598
    %v747 = vmul.f32 %v672, %v599
    %v748 = vmul.f32 %v673, %v599
    %v749 = vmul.f32 %v674, %v599
    %v750 = vld [vmem:[#allocation5] sm:$0x7]
    %v752 = vlaneseq
    %v753 = vshrl.u32 %v752, 7
    %v754 = vsub.s32 0, %v753
    %v755 = vrot.slane %v750, %v754
    %v756 = vlaneseq
    %v757 = vshrl.u32 %v756, 7
    %v758 = vsub.s32 1, %v757
    %v759 = vrot.slane %v750, %v758
    %v760 = vlaneseq
    %v761 = vshrl.u32 %v760, 7
    %v762 = vsub.s32 2, %v761
    %v763 = vrot.slane %v750, %v762
    %v767 = vmul.f32 %v675, %v755
    %v768 = vmul.f32 %v676, %v759
    %v769 = vmul.f32 %v677, %v763
    %v770 = vmul.f32 %v678, %v755
    %v771 = vmul.f32 %v679, %v759
    %v772 = vmul.f32 %v680, %v763
    %v773 = vmul.f32 %v681, %v755
    %v774 = vmul.f32 %v682, %v759
    %v775 = vmul.f32 %v683, %v763
    %v776 = vmul.f32 %v684, %v755
    %v777 = vmul.f32 %v685, %v759
    %v778 = vmul.f32 %v686, %v763
    %v779 = vmul.f32 %v687, %v755
    %v780 = vmul.f32 %v688, %v759
    %v781 = vmul.f32 %v689, %v763
    %v782 = vmul.f32 %v690, %v755
    %v783 = vmul.f32 %v691, %v759
    %v784 = vmul.f32 %v692, %v763
    %v785 = vmul.f32 %v693, %v755
    %v786 = vmul.f32 %v694, %v759
    %v787 = vmul.f32 %v695, %v763
    %v788 = vmul.f32 %v696, %v755
    %v789 = vmul.f32 %v697, %v759
    %v790 = vmul.f32 %v698, %v763
    %v791 = vmul.f32 %v699, %v755
    %v792 = vmul.f32 %v700, %v759
    %v793 = vmul.f32 %v701, %v763
    %v794 = vmul.f32 %v702, %v755
    %v795 = vmul.f32 %v703, %v759
    %v796 = vmul.f32 %v704, %v763
    %v797 = vmul.f32 %v705, %v755
    %v798 = vmul.f32 %v706, %v759
    %v799 = vmul.f32 %v707, %v763
    %v800 = vmul.f32 %v708, %v755
    %v801 = vmul.f32 %v709, %v759
    %v802 = vmul.f32 %v710, %v763
    %v803 = vmul.f32 %v711, %v755
    %v804 = vmul.f32 %v712, %v759
    %v805 = vmul.f32 %v713, %v763
    %v806 = vmul.f32 %v714, %v755
    %v807 = vmul.f32 %v715, %v759
    %v808 = vmul.f32 %v716, %v763
    %v809 = vmul.f32 %v717, %v755
    %v810 = vmul.f32 %v718, %v759
    %v811 = vmul.f32 %v719, %v763
    %v812 = vmul.f32 %v720, %v755
    %v813 = vmul.f32 %v721, %v759
    %v814 = vmul.f32 %v722, %v763
    %v815 = vmul.f32 %v723, %v755
    %v816 = vmul.f32 %v724, %v759
    %v817 = vmul.f32 %v725, %v763
    %v818 = vmul.f32 %v726, %v755
    %v819 = vmul.f32 %v727, %v759
    %v820 = vmul.f32 %v728, %v763
    %v821 = vmul.f32 %v729, %v755
    %v822 = vmul.f32 %v730, %v759
    %v823 = vmul.f32 %v731, %v763
    %v824 = vmul.f32 %v732, %v755
    %v825 = vmul.f32 %v733, %v759
    %v826 = vmul.f32 %v734, %v763
    %v827 = vmul.f32 %v735, %v755
    %v828 = vmul.f32 %v736, %v759
    %v829 = vmul.f32 %v737, %v763
    %v830 = vmul.f32 %v738, %v755
    %v831 = vmul.f32 %v739, %v759
    %v832 = vmul.f32 %v740, %v763
    %v833 = vmul.f32 %v741, %v755
    %v834 = vmul.f32 %v742, %v759
    %v835 = vmul.f32 %v743, %v763
    %v836 = vmul.f32 %v744, %v755
    %v837 = vmul.f32 %v745, %v759
    %v838 = vmul.f32 %v746, %v763
    %v839 = vmul.f32 %v747, %v755
    %v840 = vmul.f32 %v748, %v759
    %v841 = vmul.f32 %v749, %v763
    %v842 = vld [vmem:[%s2] sm:$0x7]
    %v844 = vlaneseq
    %v845 = vshrl.u32 %v844, 7
    %v846 = vsub.s32 0, %v845
    %v847 = vrot.slane %v842, %v846
    %v848 = vlaneseq
    %v849 = vshrl.u32 %v848, 7
    %v850 = vsub.s32 1, %v849
    %v851 = vrot.slane %v842, %v850
    %v852 = vlaneseq
    %v853 = vshrl.u32 %v852, 7
    %v854 = vsub.s32 2, %v853
    %v855 = vrot.slane %v842, %v854
    %v859 = vadd.f32 %v767, %v847
    %v860 = vadd.f32 %v768, %v851
    %v861 = vadd.f32 %v769, %v855
    %v862 = vadd.f32 %v770, %v847
    %v863 = vadd.f32 %v771, %v851
    %v864 = vadd.f32 %v772, %v855
    %v865 = vadd.f32 %v773, %v847
    %v866 = vadd.f32 %v774, %v851
    %v867 = vadd.f32 %v775, %v855
    %v868 = vadd.f32 %v776, %v847
    %v869 = vadd.f32 %v777, %v851
    %v870 = vadd.f32 %v778, %v855
    %v871 = vadd.f32 %v779, %v847
    %v872 = vadd.f32 %v780, %v851
    %v873 = vadd.f32 %v781, %v855
    %v874 = vadd.f32 %v782, %v847
    %v875 = vadd.f32 %v783, %v851
    %v876 = vadd.f32 %v784, %v855
    %v877 = vadd.f32 %v785, %v847
    %v878 = vadd.f32 %v786, %v851
    %v879 = vadd.f32 %v787, %v855
    %v880 = vadd.f32 %v788, %v847
    %v881 = vadd.f32 %v789, %v851
    %v882 = vadd.f32 %v790, %v855
    %v883 = vadd.f32 %v791, %v847
    %v884 = vadd.f32 %v792, %v851
    %v885 = vadd.f32 %v793, %v855
    %v886 = vadd.f32 %v794, %v847
    %v887 = vadd.f32 %v795, %v851
    %v888 = vadd.f32 %v796, %v855
    %v889 = vadd.f32 %v797, %v847
    %v890 = vadd.f32 %v798, %v851
    %v891 = vadd.f32 %v799, %v855
    %v892 = vadd.f32 %v800, %v847
    %v893 = vadd.f32 %v801, %v851
    %v894 = vadd.f32 %v802, %v855
    %v895 = vadd.f32 %v803, %v847
    %v896 = vadd.f32 %v804, %v851
    %v897 = vadd.f32 %v805, %v855
    %v898 = vadd.f32 %v806, %v847
    %v899 = vadd.f32 %v807, %v851
    %v900 = vadd.f32 %v808, %v855
    %v901 = vadd.f32 %v809, %v847
    %v902 = vadd.f32 %v810, %v851
    %v903 = vadd.f32 %v811, %v855
    %v904 = vadd.f32 %v812, %v847
    %v905 = vadd.f32 %v813, %v851
    %v906 = vadd.f32 %v814, %v855
    %v907 = vadd.f32 %v815, %v847
    %v908 = vadd.f32 %v816, %v851
    %v909 = vadd.f32 %v817, %v855
    %v910 = vadd.f32 %v818, %v847
    %v911 = vadd.f32 %v819, %v851
    %v912 = vadd.f32 %v820, %v855
    %v913 = vadd.f32 %v821, %v847
    %v914 = vadd.f32 %v822, %v851
    %v915 = vadd.f32 %v823, %v855
    %v916 = vadd.f32 %v824, %v847
    %v917 = vadd.f32 %v825, %v851
    %v918 = vadd.f32 %v826, %v855
    %v919 = vadd.f32 %v827, %v847
    %v920 = vadd.f32 %v828, %v851
    %v921 = vadd.f32 %v829, %v855
    %v922 = vadd.f32 %v830, %v847
    %v923 = vadd.f32 %v831, %v851
    %v924 = vadd.f32 %v832, %v855
    %v925 = vadd.f32 %v833, %v847
    %v926 = vadd.f32 %v834, %v851
    %v927 = vadd.f32 %v835, %v855
    %v928 = vadd.f32 %v836, %v847
    %v929 = vadd.f32 %v837, %v851
    %v930 = vadd.f32 %v838, %v855
    %v931 = vadd.f32 %v839, %v847
    %v932 = vadd.f32 %v840, %v851
    %v933 = vadd.f32 %v841, %v855
    %v934 = vld [vmem:[#allocation7] sm:$0xff]
    %v935 = vld [vmem:[#allocation7 + $0x8] sm:$0xff]
    %v936 = vld [vmem:[#allocation7 + $0x10] sm:$0xff]
    %v937 = vld [vmem:[#allocation7 + $0x18] sm:$0xff]
    %v938 = vld [vmem:[#allocation7 + $0x20] sm:$0xff]
    %v939 = vld [vmem:[#allocation7 + $0x28] sm:$0xff]
    %v940 = vld [vmem:[#allocation7 + $0x30] sm:$0xff]
    %v941 = vld [vmem:[#allocation7 + $0x38] sm:$0xff]
    %v942 = vld [vmem:[#allocation7 + $0x40] sm:$0xff]
    %v943 = vld [vmem:[#allocation7 + $0x48] sm:$0xff]
    %v944 = vld [vmem:[#allocation7 + $0x50] sm:$0xff]
    %v945 = vld [vmem:[#allocation7 + $0x58] sm:$0xff]
    %v946 = vld [vmem:[#allocation7 + $0x60] sm:$0xff]
    %v947 = vld [vmem:[#allocation7 + $0x68] sm:$0xff]
    %v948 = vld [vmem:[#allocation7 + $0x70] sm:$0xff]
    %v949 = vld [vmem:[#allocation7 + $0x78] sm:$0xff]
    %v950 = vld [vmem:[#allocation7 + $0x80] sm:$0xff]
    %v951 = vld [vmem:[#allocation7 + $0x88] sm:$0xff]
    %v952 = vld [vmem:[#allocation7 + $0x90] sm:$0xff]
    %v953 = vld [vmem:[#allocation7 + $0x98] sm:$0xff]
    %v954 = vld [vmem:[#allocation7 + $0xa0] sm:$0xff]
    %v955 = vld [vmem:[#allocation7 + $0xa8] sm:$0xff]
    %v956 = vld [vmem:[#allocation7 + $0xb0] sm:$0xff]
    %v957 = vld [vmem:[#allocation7 + $0xb8] sm:$0xff]
    %v958 = vld [vmem:[#allocation7 + $0xc0] sm:$0xff]
    %v959 = vld [vmem:[#allocation7 + $0xc8] sm:$0xff]
    %v960 = vld [vmem:[#allocation7 + $0xd0] sm:$0xff]
    %v961 = vld [vmem:[#allocation7 + $0xd8] sm:$0xff]
    %v962 = vld [vmem:[#allocation7 + $0xe0] sm:$0xff]
    %v963 = vld [vmem:[#allocation7 + $0xe8] sm:$0xff]
    %v964 = vld [vmem:[#allocation7 + $0xf0] sm:$0xff]
    %v965 = vld [vmem:[#allocation7 + $0xf8] sm:$0xff]
    %v966 = vld [vmem:[#allocation7 + $0x100] sm:$0xff]
    %v967 = vld [vmem:[#allocation7 + $0x108] sm:$0xff]
    %v968 = vld [vmem:[#allocation7 + $0x110] sm:$0xff]
    %v969 = vld [vmem:[#allocation7 + $0x118] sm:$0xff]
    %v970 = vld [vmem:[#allocation7 + $0x120] sm:$0xff]
    %v971 = vld [vmem:[#allocation7 + $0x128] sm:$0xff]
    %v972 = vld [vmem:[#allocation7 + $0x130] sm:$0xff]
    %v973 = vld [vmem:[#allocation7 + $0x138] sm:$0xff]
    %v974 = vld [vmem:[#allocation7 + $0x140] sm:$0xff]
    %v975 = vld [vmem:[#allocation7 + $0x148] sm:$0xff]
    %v976 = vld [vmem:[#allocation7 + $0x150] sm:$0xff]
    %v977 = vld [vmem:[#allocation7 + $0x158] sm:$0xff]
    %v978 = vld [vmem:[#allocation7 + $0x160] sm:$0xff]
    %v979 = vld [vmem:[#allocation7 + $0x168] sm:$0xff]
    %v980 = vld [vmem:[#allocation7 + $0x170] sm:$0xff]
    %v981 = vld [vmem:[#allocation7 + $0x178] sm:$0xff]
    %v982 = vld [vmem:[%s4] sm:$0x1]
    %v984 = vlaneseq
    %v985 = vshrl.u32 %v984, 7
    %v986 = vsub.s32 0, %v985
    %v987 = vrot.slane %v982, %v986
    %989 = vmatprep.subr.mxu0 0.0
    %990 = vmatpush1.msra.mxu0 %v949
    %991 = vmatprep.subr.mxu0 0.0
    %992 = vmatpush1.msra.mxu0 %v948
    %993 = vmatprep.subr.mxu0 0.0
    %994 = vmatpush1.msra.mxu0 %v947
    %995 = vmatprep.subr.mxu0 0.0
    %996 = vmatpush1.msra.mxu0 %v946
    %997 = vmatprep.subr.mxu0 0.0
    %998 = vmatpush1.msra.mxu0 %v945
    %999 = vmatprep.subr.mxu0 0.0
    %1000 = vmatpush1.msra.mxu0 %v944
    %1001 = vmatprep.subr.mxu0 0.0
    %1002 = vmatpush1.msra.mxu0 %v943
    %1003 = vmatprep.subr.mxu0 0.0
    %1004 = vmatpush1.msra.mxu0 %v942
    %1005 = vmatprep.subr.mxu0 0.0
    %1006 = vmatpush1.msra.mxu0 %v941
    %1007 = vmatprep.subr.mxu0 0.0
    %1008 = vmatpush1.msra.mxu0 %v940
    %1009 = vmatprep.subr.mxu0 0.0
    %1010 = vmatpush1.msra.mxu0 %v939
    %1011 = vmatprep.subr.mxu0 0.0
    %1012 = vmatpush1.msra.mxu0 %v938
    %1013 = vmatprep.subr.mxu0 0.0
    %1014 = vmatpush1.msra.mxu0 %v937
    %1015 = vmatprep.subr.mxu0 0.0
    %1016 = vmatpush1.msra.mxu0 %v936
    %1017 = vmatprep.subr.mxu0 0.0
    %1018 = vmatpush1.msra.mxu0 %v935
    %1019 = vmatprep.subr.mxu0 0.0
    %1020 = vmatpush1.msra.mxu0 %v934
    %1021 = vmatprep.subr.mxu0 0.0
    %1022 = vmatpush2.msra.mxu0 %v965
    %1023 = vmatprep.subr.mxu0 0.0
    %1024 = vmatpush2.msra.mxu0 %v964
    %1025 = vmatprep.subr.mxu0 0.0
    %1026 = vmatpush2.msra.mxu0 %v963
    %1027 = vmatprep.subr.mxu0 0.0
    %1028 = vmatpush2.msra.mxu0 %v962
    %1029 = vmatprep.subr.mxu0 0.0
    %1030 = vmatpush2.msra.mxu0 %v961
    %1031 = vmatprep.subr.mxu0 0.0
    %1032 = vmatpush2.msra.mxu0 %v960
    %1033 = vmatprep.subr.mxu0 0.0
    %1034 = vmatpush2.msra.mxu0 %v959
    %1035 = vmatprep.subr.mxu0 0.0
    %1036 = vmatpush2.msra.mxu0 %v958
    %1037 = vmatprep.subr.mxu0 0.0
    %1038 = vmatpush2.msra.mxu0 %v957
    %1039 = vmatprep.subr.mxu0 0.0
    %1040 = vmatpush2.msra.mxu0 %v956
    %1041 = vmatprep.subr.mxu0 0.0
    %1042 = vmatpush2.msra.mxu0 %v955
    %1043 = vmatprep.subr.mxu0 0.0
    %1044 = vmatpush2.msra.mxu0 %v954
    %1045 = vmatprep.subr.mxu0 0.0
    %1046 = vmatpush2.msra.mxu0 %v953
    %1047 = vmatprep.subr.mxu0 0.0
    %1048 = vmatpush2.msra.mxu0 %v952
    %1049 = vmatprep.subr.mxu0 0.0
    %1050 = vmatpush2.msra.mxu0 %v951
    %1051 = vmatprep.subr.mxu0 0.0
    %1052 = vmatpush2.msra.mxu0 %v950
    %1053 = vmatprep.mubr.f32.mxu0 %v860
    %1054 = vmatmul.mubr.f32.gmra.mxu0 %v859
    %v1055 = vpop.f32.mrf.mxu0
    %v1056 = vadd.f32 %v987, %v1055
    %v1057 = vpop.f32.mrf.mxu0
    %1058 = vmatprep.mubr.f32.mxu0 %v863
    %1059 = vmatmul.mubr.f32.gmra.mxu0 %v862
    %v1060 = vpop.f32.mrf.mxu0
    %v1061 = vadd.f32 %v987, %v1060
    %v1062 = vpop.f32.mrf.mxu0
    %1063 = vmatprep.mubr.f32.mxu0 %v866
    %1064 = vmatmul.mubr.f32.gmra.mxu0 %v865
    %v1065 = vpop.f32.mrf.mxu0
    %v1066 = vadd.f32 %v987, %v1065
    %v1067 = vpop.f32.mrf.mxu0
    %1068 = vmatprep.mubr.f32.mxu0 %v869
    %1069 = vmatmul.mubr.f32.gmra.mxu0 %v868
    %v1070 = vpop.f32.mrf.mxu0
    %v1071 = vadd.f32 %v987, %v1070
    %v1072 = vpop.f32.mrf.mxu0
    %1073 = vmatprep.mubr.f32.mxu0 %v872
    %1074 = vmatmul.mubr.f32.gmra.mxu0 %v871
    %v1075 = vpop.f32.mrf.mxu0
    %v1076 = vadd.f32 %v987, %v1075
    %v1077 = vpop.f32.mrf.mxu0
    %1078 = vmatprep.mubr.f32.mxu0 %v875
    %1079 = vmatmul.mubr.f32.gmra.mxu0 %v874
    %v1080 = vpop.f32.mrf.mxu0
    %v1081 = vadd.f32 %v987, %v1080
    %v1082 = vpop.f32.mrf.mxu0
    %1083 = vmatprep.mubr.f32.mxu0 %v878
    %1084 = vmatmul.mubr.f32.gmra.mxu0 %v877
    %v1085 = vpop.f32.mrf.mxu0
    %v1086 = vadd.f32 %v987, %v1085
    %v1087 = vpop.f32.mrf.mxu0
    %1088 = vmatprep.mubr.f32.mxu0 %v881
    %1089 = vmatmul.mubr.f32.gmra.mxu0 %v880
    %v1090 = vpop.f32.mrf.mxu0
    %v1091 = vadd.f32 %v987, %v1090
    %v1092 = vpop.f32.mrf.mxu0
    %1093 = vmatprep.mubr.f32.mxu0 %v884
    %1094 = vmatmul.mubr.f32.gmra.mxu0 %v883
    %v1095 = vpop.f32.mrf.mxu0
    %v1096 = vadd.f32 %v987, %v1095
    %v1097 = vpop.f32.mrf.mxu0
    %1098 = vmatprep.mubr.f32.mxu0 %v887
    %1099 = vmatmul.mubr.f32.gmra.mxu0 %v886
    %v1100 = vpop.f32.mrf.mxu0
    %v1101 = vadd.f32 %v987, %v1100
    %v1102 = vpop.f32.mrf.mxu0
    %1103 = vmatprep.mubr.f32.mxu0 %v890
    %1104 = vmatmul.mubr.f32.gmra.mxu0 %v889
    %v1105 = vpop.f32.mrf.mxu0
    %v1106 = vadd.f32 %v987, %v1105
    %v1107 = vpop.f32.mrf.mxu0
    %1108 = vmatprep.mubr.f32.mxu0 %v893
    %1109 = vmatmul.mubr.f32.gmra.mxu0 %v892
    %v1110 = vpop.f32.mrf.mxu0
    %v1111 = vadd.f32 %v987, %v1110
    %v1112 = vpop.f32.mrf.mxu0
    %1113 = vmatprep.mubr.f32.mxu0 %v896
    %1114 = vmatmul.mubr.f32.gmra.mxu0 %v895
    %v1115 = vpop.f32.mrf.mxu0
    %v1116 = vadd.f32 %v987, %v1115
    %v1117 = vpop.f32.mrf.mxu0
    %1118 = vmatprep.mubr.f32.mxu0 %v899
    %1119 = vmatmul.mubr.f32.gmra.mxu0 %v898
    %v1120 = vpop.f32.mrf.mxu0
    %v1121 = vadd.f32 %v987, %v1120
    %v1122 = vpop.f32.mrf.mxu0
    %1123 = vmatprep.mubr.f32.mxu0 %v902
    %1124 = vmatmul.mubr.f32.gmra.mxu0 %v901
    %v1125 = vpop.f32.mrf.mxu0
    %v1126 = vadd.f32 %v987, %v1125
    %v1127 = vpop.f32.mrf.mxu0
    %1128 = vmatprep.mubr.f32.mxu0 %v905
    %1129 = vmatmul.mubr.f32.gmra.mxu0 %v904
    %v1130 = vpop.f32.mrf.mxu0
    %v1131 = vadd.f32 %v987, %v1130
    %v1132 = vpop.f32.mrf.mxu0
    %1133 = vmatprep.mubr.f32.mxu0 %v908
    %1134 = vmatmul.mubr.f32.gmra.mxu0 %v907
    %v1135 = vpop.f32.mrf.mxu0
    %v1136 = vadd.f32 %v987, %v1135
    %v1137 = vpop.f32.mrf.mxu0
    %1138 = vmatprep.mubr.f32.mxu0 %v911
    %1139 = vmatmul.mubr.f32.gmra.mxu0 %v910
    %v1140 = vpop.f32.mrf.mxu0
    %v1141 = vadd.f32 %v987, %v1140
    %v1142 = vpop.f32.mrf.mxu0
    %1143 = vmatprep.mubr.f32.mxu0 %v914
    %1144 = vmatmul.mubr.f32.gmra.mxu0 %v913
    %v1145 = vpop.f32.mrf.mxu0
    %v1146 = vadd.f32 %v987, %v1145
    %v1147 = vpop.f32.mrf.mxu0
    %1148 = vmatprep.mubr.f32.mxu0 %v917
    %1149 = vmatmul.mubr.f32.gmra.mxu0 %v916
    %v1150 = vpop.f32.mrf.mxu0
    %v1151 = vadd.f32 %v987, %v1150
    %v1152 = vpop.f32.mrf.mxu0
    %1153 = vmatprep.mubr.f32.mxu0 %v920
    %1154 = vmatmul.mubr.f32.gmra.mxu0 %v919
    %v1155 = vpop.f32.mrf.mxu0
    %v1156 = vadd.f32 %v987, %v1155
    %v1157 = vpop.f32.mrf.mxu0
    %1158 = vmatprep.mubr.f32.mxu0 %v923
    %1159 = vmatmul.mubr.f32.gmra.mxu0 %v922
    %v1160 = vpop.f32.mrf.mxu0
    %v1161 = vadd.f32 %v987, %v1160
    %v1162 = vpop.f32.mrf.mxu0
    %1163 = vmatprep.mubr.f32.mxu0 %v926
    %1164 = vmatmul.mubr.f32.gmra.mxu0 %v925
    %v1165 = vpop.f32.mrf.mxu0
    %v1166 = vadd.f32 %v987, %v1165
    %v1167 = vpop.f32.mrf.mxu0
    %1168 = vmatprep.mubr.f32.mxu0 %v929
    %1169 = vmatmul.mubr.f32.gmra.mxu0 %v928
    %v1170 = vpop.f32.mrf.mxu0
    %v1171 = vadd.f32 %v987, %v1170
    %v1172 = vpop.f32.mrf.mxu0
    %1173 = vmatprep.mubr.f32.mxu0 %v932
    %1174 = vmatmul.mubr.f32.gmra.mxu0 %v931
    %v1175 = vpop.f32.mrf.mxu0
    %v1176 = vadd.f32 %v987, %v1175
    %v1177 = vpop.f32.mrf.mxu0
    %1178 = vdwg.mxu0
    %1179 = vmatprep.subr.mxu0 0.0
    %1180 = vmatpush1.msra.mxu0 %v981
    %1181 = vmatprep.subr.mxu0 0.0
    %1182 = vmatpush1.msra.mxu0 %v980
    %1183 = vmatprep.subr.mxu0 0.0
    %1184 = vmatpush1.msra.mxu0 %v979
    %1185 = vmatprep.subr.mxu0 0.0
    %1186 = vmatpush1.msra.mxu0 %v978
    %1187 = vmatprep.subr.mxu0 0.0
    %1188 = vmatpush1.msra.mxu0 %v977
    %1189 = vmatprep.subr.mxu0 0.0
    %1190 = vmatpush1.msra.mxu0 %v976
    %1191 = vmatprep.subr.mxu0 0.0
    %1192 = vmatpush1.msra.mxu0 %v975
    %1193 = vmatprep.subr.mxu0 0.0
    %1194 = vmatpush1.msra.mxu0 %v974
    %1195 = vmatprep.subr.mxu0 0.0
    %1196 = vmatpush1.msra.mxu0 %v973
    %1197 = vmatprep.subr.mxu0 0.0
    %1198 = vmatpush1.msra.mxu0 %v972
    %1199 = vmatprep.subr.mxu0 0.0
    %1200 = vmatpush1.msra.mxu0 %v971
    %1201 = vmatprep.subr.mxu0 0.0
    %1202 = vmatpush1.msra.mxu0 %v970
    %1203 = vmatprep.subr.mxu0 0.0
    %1204 = vmatpush1.msra.mxu0 %v969
    %1205 = vmatprep.subr.mxu0 0.0
    %1206 = vmatpush1.msra.mxu0 %v968
    %1207 = vmatprep.subr.mxu0 0.0
    %1208 = vmatpush1.msra.mxu0 %v967
    %1209 = vmatprep.subr.mxu0 0.0
    %1210 = vmatpush1.msra.mxu0 %v966
    %1211 = vmatprep.subr.mxu0 0.0
    %1212 = vmatpush2.msra.mxu0 0.0
    %1213 = vmatprep.subr.mxu0 0.0
    %1214 = vmatpush2.msra.mxu0 0.0
    %1215 = vmatprep.subr.mxu0 0.0
    %1216 = vmatpush2.msra.mxu0 0.0
    %1217 = vmatprep.subr.mxu0 0.0
    %1218 = vmatpush2.msra.mxu0 0.0
    %1219 = vmatprep.subr.mxu0 0.0
    %1220 = vmatpush2.msra.mxu0 0.0
    %1221 = vmatprep.subr.mxu0 0.0
    %1222 = vmatpush2.msra.mxu0 0.0
    %1223 = vmatprep.subr.mxu0 0.0
    %1224 = vmatpush2.msra.mxu0 0.0
    %1225 = vmatprep.subr.mxu0 0.0
    %1226 = vmatpush2.msra.mxu0 0.0
    %1227 = vmatprep.subr.mxu0 0.0
    %1228 = vmatpush2.msra.mxu0 0.0
    %1229 = vmatprep.subr.mxu0 0.0
    %1230 = vmatpush2.msra.mxu0 0.0
    %1231 = vmatprep.subr.mxu0 0.0
    %1232 = vmatpush2.msra.mxu0 0.0
    %1233 = vmatprep.subr.mxu0 0.0
    %1234 = vmatpush2.msra.mxu0 0.0
    %1235 = vmatprep.subr.mxu0 0.0
    %1236 = vmatpush2.msra.mxu0 0.0
    %1237 = vmatprep.subr.mxu0 0.0
    %1238 = vmatpush2.msra.mxu0 0.0
    %1239 = vmatprep.subr.mxu0 0.0
    %1240 = vmatpush2.msra.mxu0 0.0
    %1241 = vmatprep.subr.mxu0 0.0
    %1242 = vmatpush2.msra.mxu0 0.0
    %1243 = vmatprep.mubr.f32.mxu0 0.0
    %1244 = vmatmul.mubr.f32.gmra.mxu0 %v861
    %v1245 = vpop.f32.mrf.mxu0
    %v1246 = vadd.f32 %v1056, %v1245
    %v1247 = vpop.f32.mrf.mxu0
    %1248 = vmatprep.mubr.f32.mxu0 0.0
    %1249 = vmatmul.mubr.f32.gmra.mxu0 %v864
    %v1250 = vpop.f32.mrf.mxu0
    %v1251 = vadd.f32 %v1061, %v1250
    %v1252 = vpop.f32.mrf.mxu0
    %1253 = vmatprep.mubr.f32.mxu0 0.0
    %1254 = vmatmul.mubr.f32.gmra.mxu0 %v867
    %v1255 = vpop.f32.mrf.mxu0
    %v1256 = vadd.f32 %v1066, %v1255
    %v1257 = vpop.f32.mrf.mxu0
    %1258 = vmatprep.mubr.f32.mxu0 0.0
    %1259 = vmatmul.mubr.f32.gmra.mxu0 %v870
    %v1260 = vpop.f32.mrf.mxu0
    %v1261 = vadd.f32 %v1071, %v1260
    %v1262 = vpop.f32.mrf.mxu0
    %1263 = vmatprep.mubr.f32.mxu0 0.0
    %1264 = vmatmul.mubr.f32.gmra.mxu0 %v873
    %v1265 = vpop.f32.mrf.mxu0
    %v1266 = vadd.f32 %v1076, %v1265
    %v1267 = vpop.f32.mrf.mxu0
    %1268 = vmatprep.mubr.f32.mxu0 0.0
    %1269 = vmatmul.mubr.f32.gmra.mxu0 %v876
    %v1270 = vpop.f32.mrf.mxu0
    %v1271 = vadd.f32 %v1081, %v1270
    %v1272 = vpop.f32.mrf.mxu0
    %1273 = vmatprep.mubr.f32.mxu0 0.0
    %1274 = vmatmul.mubr.f32.gmra.mxu0 %v879
    %v1275 = vpop.f32.mrf.mxu0
    %v1276 = vadd.f32 %v1086, %v1275
    %v1277 = vpop.f32.mrf.mxu0
    %1278 = vmatprep.mubr.f32.mxu0 0.0
    %1279 = vmatmul.mubr.f32.gmra.mxu0 %v882
    %v1280 = vpop.f32.mrf.mxu0
    %v1281 = vadd.f32 %v1091, %v1280
    %v1282 = vpop.f32.mrf.mxu0
    %1283 = vmatprep.mubr.f32.mxu0 0.0
    %1284 = vmatmul.mubr.f32.gmra.mxu0 %v885
    %v1285 = vpop.f32.mrf.mxu0
    %v1286 = vadd.f32 %v1096, %v1285
    %v1287 = vpop.f32.mrf.mxu0
    %1288 = vmatprep.mubr.f32.mxu0 0.0
    %1289 = vmatmul.mubr.f32.gmra.mxu0 %v888
    %v1290 = vpop.f32.mrf.mxu0
    %v1291 = vadd.f32 %v1101, %v1290
    %v1292 = vpop.f32.mrf.mxu0
    %1293 = vmatprep.mubr.f32.mxu0 0.0
    %1294 = vmatmul.mubr.f32.gmra.mxu0 %v891
    %v1295 = vpop.f32.mrf.mxu0
    %v1296 = vadd.f32 %v1106, %v1295
    %v1297 = vpop.f32.mrf.mxu0
    %1298 = vmatprep.mubr.f32.mxu0 0.0
    %1299 = vmatmul.mubr.f32.gmra.mxu0 %v894
    %v1300 = vpop.f32.mrf.mxu0
    %v1301 = vadd.f32 %v1111, %v1300
    %v1302 = vpop.f32.mrf.mxu0
    %1303 = vmatprep.mubr.f32.mxu0 0.0
    %1304 = vmatmul.mubr.f32.gmra.mxu0 %v897
    %v1305 = vpop.f32.mrf.mxu0
    %v1306 = vadd.f32 %v1116, %v1305
    %v1307 = vpop.f32.mrf.mxu0
    %1308 = vmatprep.mubr.f32.mxu0 0.0
    %1309 = vmatmul.mubr.f32.gmra.mxu0 %v900
    %v1310 = vpop.f32.mrf.mxu0
    %v1311 = vadd.f32 %v1121, %v1310
    %v1312 = vpop.f32.mrf.mxu0
    %1313 = vmatprep.mubr.f32.mxu0 0.0
    %1314 = vmatmul.mubr.f32.gmra.mxu0 %v903
    %v1315 = vpop.f32.mrf.mxu0
    %v1316 = vadd.f32 %v1126, %v1315
    %v1317 = vpop.f32.mrf.mxu0
    %1318 = vmatprep.mubr.f32.mxu0 0.0
    %1319 = vmatmul.mubr.f32.gmra.mxu0 %v906
    %v1320 = vpop.f32.mrf.mxu0
    %v1321 = vadd.f32 %v1131, %v1320
    %v1322 = vpop.f32.mrf.mxu0
    %1323 = vmatprep.mubr.f32.mxu0 0.0
    %1324 = vmatmul.mubr.f32.gmra.mxu0 %v909
    %v1325 = vpop.f32.mrf.mxu0
    %v1326 = vadd.f32 %v1136, %v1325
    %v1327 = vpop.f32.mrf.mxu0
    %1328 = vmatprep.mubr.f32.mxu0 0.0
    %1329 = vmatmul.mubr.f32.gmra.mxu0 %v912
    %v1330 = vpop.f32.mrf.mxu0
    %v1331 = vadd.f32 %v1141, %v1330
    %v1332 = vpop.f32.mrf.mxu0
    %1333 = vmatprep.mubr.f32.mxu0 0.0
    %1334 = vmatmul.mubr.f32.gmra.mxu0 %v915
    %v1335 = vpop.f32.mrf.mxu0
    %v1336 = vadd.f32 %v1146, %v1335
    %v1337 = vpop.f32.mrf.mxu0
    %1338 = vmatprep.mubr.f32.mxu0 0.0
    %1339 = vmatmul.mubr.f32.gmra.mxu0 %v918
    %v1340 = vpop.f32.mrf.mxu0
    %v1341 = vadd.f32 %v1151, %v1340
    %v1342 = vpop.f32.mrf.mxu0
    %1343 = vmatprep.mubr.f32.mxu0 0.0
    %1344 = vmatmul.mubr.f32.gmra.mxu0 %v921
    %v1345 = vpop.f32.mrf.mxu0
    %v1346 = vadd.f32 %v1156, %v1345
    %v1347 = vpop.f32.mrf.mxu0
    %1348 = vmatprep.mubr.f32.mxu0 0.0
    %1349 = vmatmul.mubr.f32.gmra.mxu0 %v924
    %v1350 = vpop.f32.mrf.mxu0
    %v1351 = vadd.f32 %v1161, %v1350
    %v1352 = vpop.f32.mrf.mxu0
    %1353 = vmatprep.mubr.f32.mxu0 0.0
    %1354 = vmatmul.mubr.f32.gmra.mxu0 %v927
    %v1355 = vpop.f32.mrf.mxu0
    %v1356 = vadd.f32 %v1166, %v1355
    %v1357 = vpop.f32.mrf.mxu0
    %1358 = vmatprep.mubr.f32.mxu0 0.0
    %1359 = vmatmul.mubr.f32.gmra.mxu0 %v930
    %v1360 = vpop.f32.mrf.mxu0
    %v1361 = vadd.f32 %v1171, %v1360
    %v1362 = vpop.f32.mrf.mxu0
    %1363 = vmatprep.mubr.f32.mxu0 0.0
    %1364 = vmatmul.mubr.f32.gmra.mxu0 %v933
    %v1365 = vpop.f32.mrf.mxu0
    %v1366 = vadd.f32 %v1176, %v1365
    %v1367 = vpop.f32.mrf.mxu0
    %1368 = vdwg.mxu0
    %v1369 = vmax.f32 %v1246, 0.0
    %v1370 = vmax.f32 %v1251, 0.0
    %v1371 = vmax.f32 %v1256, 0.0
    %v1372 = vmax.f32 %v1261, 0.0
    %v1373 = vmax.f32 %v1266, 0.0
    %v1374 = vmax.f32 %v1271, 0.0
    %v1375 = vmax.f32 %v1276, 0.0
    %v1376 = vmax.f32 %v1281, 0.0
    %v1377 = vmax.f32 %v1286, 0.0
    %v1378 = vmax.f32 %v1291, 0.0
    %v1379 = vmax.f32 %v1296, 0.0
    %v1380 = vmax.f32 %v1301, 0.0
    %v1381 = vmax.f32 %v1306, 0.0
    %v1382 = vmax.f32 %v1311, 0.0
    %v1383 = vmax.f32 %v1316, 0.0
    %v1384 = vmax.f32 %v1321, 0.0
    %v1385 = vmax.f32 %v1326, 0.0
    %v1386 = vmax.f32 %v1331, 0.0
    %v1387 = vmax.f32 %v1336, 0.0
    %v1388 = vmax.f32 %v1341, 0.0
    %v1389 = vmax.f32 %v1346, 0.0
    %v1390 = vmax.f32 %v1351, 0.0
    %v1391 = vmax.f32 %v1356, 0.0
    %v1392 = vmax.f32 %v1361, 0.0
    %v1393 = vmax.f32 %v1366, 0.0
    %v1394 = vld [vmem:[#allocation8] sm:$0xff]
    %v1395 = vld [vmem:[#allocation8 + $0x8] sm:$0xff]
    %v1396 = vld [vmem:[#allocation8 + $0x10] sm:$0xff]
    %v1397 = vld [vmem:[#allocation8 + $0x18] sm:$0xff]
    %v1398 = vld [vmem:[#allocation8 + $0x20] sm:$0xff]
    %v1399 = vld [vmem:[#allocation8 + $0x28] sm:$0xff]
    %v1400 = vld [vmem:[#allocation8 + $0x30] sm:$0xff]
    %v1401 = vld [vmem:[#allocation8 + $0x38] sm:$0xff]
    %v1402 = vld [vmem:[#allocation8 + $0x40] sm:$0xff]
    %v1403 = vld [vmem:[#allocation8 + $0x48] sm:$0xff]
    %v1404 = vld [vmem:[#allocation8 + $0x50] sm:$0xff]
    %v1405 = vld [vmem:[#allocation8 + $0x58] sm:$0xff]
    %v1406 = vld [vmem:[#allocation8 + $0x60] sm:$0xff]
    %v1407 = vld [vmem:[#allocation8 + $0x68] sm:$0xff]
    %v1408 = vld [vmem:[#allocation8 + $0x70] sm:$0xff]
    %v1409 = vld [vmem:[#allocation8 + $0x78] sm:$0xff]
    %v1410 = vld [vmem:[%s6] sm:$0x1]
    %v1412 = vlaneseq
    %v1413 = vshrl.u32 %v1412, 7
    %v1414 = vsub.s32 0, %v1413
    %v1415 = vrot.slane %v1410, %v1414
    %1417 = vmatprep.subr.mxu0 0.0
    %1418 = vmatpush1.msra.mxu0 %v1409
    %1419 = vmatprep.subr.mxu0 0.0
    %1420 = vmatpush1.msra.mxu0 %v1408
    %1421 = vmatprep.subr.mxu0 0.0
    %1422 = vmatpush1.msra.mxu0 %v1407
    %1423 = vmatprep.subr.mxu0 0.0
    %1424 = vmatpush1.msra.mxu0 %v1406
    %1425 = vmatprep.subr.mxu0 0.0
    %1426 = vmatpush1.msra.mxu0 %v1405
    %1427 = vmatprep.subr.mxu0 0.0
    %1428 = vmatpush1.msra.mxu0 %v1404
    %1429 = vmatprep.subr.mxu0 0.0
    %1430 = vmatpush1.msra.mxu0 %v1403
    %1431 = vmatprep.subr.mxu0 0.0
    %1432 = vmatpush1.msra.mxu0 %v1402
    %1433 = vmatprep.subr.mxu0 0.0
    %1434 = vmatpush1.msra.mxu0 %v1401
    %1435 = vmatprep.subr.mxu0 0.0
    %1436 = vmatpush1.msra.mxu0 %v1400
    %1437 = vmatprep.subr.mxu0 0.0
    %1438 = vmatpush1.msra.mxu0 %v1399
    %1439 = vmatprep.subr.mxu0 0.0
    %1440 = vmatpush1.msra.mxu0 %v1398
    %1441 = vmatprep.subr.mxu0 0.0
    %1442 = vmatpush1.msra.mxu0 %v1397
    %1443 = vmatprep.subr.mxu0 0.0
    %1444 = vmatpush1.msra.mxu0 %v1396
    %1445 = vmatprep.subr.mxu0 0.0
    %1446 = vmatpush1.msra.mxu0 %v1395
    %1447 = vmatprep.subr.mxu0 0.0
    %1448 = vmatpush1.msra.mxu0 %v1394
    %1449 = vmatprep.subr.mxu0 0.0
    %1450 = vmatpush2.msra.mxu0 0.0
    %1451 = vmatprep.subr.mxu0 0.0
    %1452 = vmatpush2.msra.mxu0 0.0
    %1453 = vmatprep.subr.mxu0 0.0
    %1454 = vmatpush2.msra.mxu0 0.0
    %1455 = vmatprep.subr.mxu0 0.0
    %1456 = vmatpush2.msra.mxu0 0.0
    %1457 = vmatprep.subr.mxu0 0.0
    %1458 = vmatpush2.msra.mxu0 0.0
    %1459 = vmatprep.subr.mxu0 0.0
    %1460 = vmatpush2.msra.mxu0 0.0
    %1461 = vmatprep.subr.mxu0 0.0
    %1462 = vmatpush2.msra.mxu0 0.0
    %1463 = vmatprep.subr.mxu0 0.0
    %1464 = vmatpush2.msra.mxu0 0.0
    %1465 = vmatprep.subr.mxu0 0.0
    %1466 = vmatpush2.msra.mxu0 0.0
    %1467 = vmatprep.subr.mxu0 0.0
    %1468 = vmatpush2.msra.mxu0 0.0
    %1469 = vmatprep.subr.mxu0 0.0
    %1470 = vmatpush2.msra.mxu0 0.0
    %1471 = vmatprep.subr.mxu0 0.0
    %1472 = vmatpush2.msra.mxu0 0.0
    %1473 = vmatprep.subr.mxu0 0.0
    %1474 = vmatpush2.msra.mxu0 0.0
    %1475 = vmatprep.subr.mxu0 0.0
    %1476 = vmatpush2.msra.mxu0 0.0
    %1477 = vmatprep.subr.mxu0 0.0
    %1478 = vmatpush2.msra.mxu0 0.0
    %1479 = vmatprep.subr.mxu0 0.0
    %1480 = vmatpush2.msra.mxu0 0.0
    %1481 = vmatprep.mubr.f32.mxu0 0.0
    %1482 = vmatmul.mubr.f32.gmra.mxu0 %v1369
    %v1483 = vpop.f32.mrf.mxu0
    %v1484 = vadd.f32 %v1415, %v1483
    %v1485 = vpop.f32.mrf.mxu0
    %1486 = vmatprep.mubr.f32.mxu0 0.0
    %1487 = vmatmul.mubr.f32.gmra.mxu0 %v1370
    %v1488 = vpop.f32.mrf.mxu0
    %v1489 = vadd.f32 %v1415, %v1488
    %v1490 = vpop.f32.mrf.mxu0
    %1491 = vmatprep.mubr.f32.mxu0 0.0
    %1492 = vmatmul.mubr.f32.gmra.mxu0 %v1371
    %v1493 = vpop.f32.mrf.mxu0
    %v1494 = vadd.f32 %v1415, %v1493
    %v1495 = vpop.f32.mrf.mxu0
    %1496 = vmatprep.mubr.f32.mxu0 0.0
    %1497 = vmatmul.mubr.f32.gmra.mxu0 %v1372
    %v1498 = vpop.f32.mrf.mxu0
    %v1499 = vadd.f32 %v1415, %v1498
    %v1500 = vpop.f32.mrf.mxu0
    %1501 = vmatprep.mubr.f32.mxu0 0.0
    %1502 = vmatmul.mubr.f32.gmra.mxu0 %v1373
    %v1503 = vpop.f32.mrf.mxu0
    %v1504 = vadd.f32 %v1415, %v1503
    %v1505 = vpop.f32.mrf.mxu0
    %1506 = vmatprep.mubr.f32.mxu0 0.0
    %1507 = vmatmul.mubr.f32.gmra.mxu0 %v1374
    %v1508 = vpop.f32.mrf.mxu0
    %v1509 = vadd.f32 %v1415, %v1508
    %v1510 = vpop.f32.mrf.mxu0
    %1511 = vmatprep.mubr.f32.mxu0 0.0
    %1512 = vmatmul.mubr.f32.gmra.mxu0 %v1375
    %v1513 = vpop.f32.mrf.mxu0
    %v1514 = vadd.f32 %v1415, %v1513
    %v1515 = vpop.f32.mrf.mxu0
    %1516 = vmatprep.mubr.f32.mxu0 0.0
    %1517 = vmatmul.mubr.f32.gmra.mxu0 %v1376
    %v1518 = vpop.f32.mrf.mxu0
    %v1519 = vadd.f32 %v1415, %v1518
    %v1520 = vpop.f32.mrf.mxu0
    %1521 = vmatprep.mubr.f32.mxu0 0.0
    %1522 = vmatmul.mubr.f32.gmra.mxu0 %v1377
    %v1523 = vpop.f32.mrf.mxu0
    %v1524 = vadd.f32 %v1415, %v1523
    %v1525 = vpop.f32.mrf.mxu0
    %1526 = vmatprep.mubr.f32.mxu0 0.0
    %1527 = vmatmul.mubr.f32.gmra.mxu0 %v1378
    %v1528 = vpop.f32.mrf.mxu0
    %v1529 = vadd.f32 %v1415, %v1528
    %v1530 = vpop.f32.mrf.mxu0
    %1531 = vmatprep.mubr.f32.mxu0 0.0
    %1532 = vmatmul.mubr.f32.gmra.mxu0 %v1379
    %v1533 = vpop.f32.mrf.mxu0
    %v1534 = vadd.f32 %v1415, %v1533
    %v1535 = vpop.f32.mrf.mxu0
    %1536 = vmatprep.mubr.f32.mxu0 0.0
    %1537 = vmatmul.mubr.f32.gmra.mxu0 %v1380
    %v1538 = vpop.f32.mrf.mxu0
    %v1539 = vadd.f32 %v1415, %v1538
    %v1540 = vpop.f32.mrf.mxu0
    %1541 = vmatprep.mubr.f32.mxu0 0.0
    %1542 = vmatmul.mubr.f32.gmra.mxu0 %v1381
    %v1543 = vpop.f32.mrf.mxu0
    %v1544 = vadd.f32 %v1415, %v1543
    %v1545 = vpop.f32.mrf.mxu0
    %1546 = vmatprep.mubr.f32.mxu0 0.0
    %1547 = vmatmul.mubr.f32.gmra.mxu0 %v1382
    %v1548 = vpop.f32.mrf.mxu0
    %v1549 = vadd.f32 %v1415, %v1548
    %v1550 = vpop.f32.mrf.mxu0
    %1551 = vmatprep.mubr.f32.mxu0 0.0
    %1552 = vmatmul.mubr.f32.gmra.mxu0 %v1383
    %v1553 = vpop.f32.mrf.mxu0
    %v1554 = vadd.f32 %v1415, %v1553
    %v1555 = vpop.f32.mrf.mxu0
    %1556 = vmatprep.mubr.f32.mxu0 0.0
    %1557 = vmatmul.mubr.f32.gmra.mxu0 %v1384
    %v1558 = vpop.f32.mrf.mxu0
    %v1559 = vadd.f32 %v1415, %v1558
    %v1560 = vpop.f32.mrf.mxu0
    %1561 = vmatprep.mubr.f32.mxu0 0.0
    %1562 = vmatmul.mubr.f32.gmra.mxu0 %v1385
    %v1563 = vpop.f32.mrf.mxu0
    %v1564 = vadd.f32 %v1415, %v1563
    %v1565 = vpop.f32.mrf.mxu0
    %1566 = vmatprep.mubr.f32.mxu0 0.0
    %1567 = vmatmul.mubr.f32.gmra.mxu0 %v1386
    %v1568 = vpop.f32.mrf.mxu0
    %v1569 = vadd.f32 %v1415, %v1568
    %v1570 = vpop.f32.mrf.mxu0
    %1571 = vmatprep.mubr.f32.mxu0 0.0
    %1572 = vmatmul.mubr.f32.gmra.mxu0 %v1387
    %v1573 = vpop.f32.mrf.mxu0
    %v1574 = vadd.f32 %v1415, %v1573
    %v1575 = vpop.f32.mrf.mxu0
    %1576 = vmatprep.mubr.f32.mxu0 0.0
    %1577 = vmatmul.mubr.f32.gmra.mxu0 %v1388
    %v1578 = vpop.f32.mrf.mxu0
    %v1579 = vadd.f32 %v1415, %v1578
    %v1580 = vpop.f32.mrf.mxu0
    %1581 = vmatprep.mubr.f32.mxu0 0.0
    %1582 = vmatmul.mubr.f32.gmra.mxu0 %v1389
    %v1583 = vpop.f32.mrf.mxu0
    %v1584 = vadd.f32 %v1415, %v1583
    %v1585 = vpop.f32.mrf.mxu0
    %1586 = vmatprep.mubr.f32.mxu0 0.0
    %1587 = vmatmul.mubr.f32.gmra.mxu0 %v1390
    %v1588 = vpop.f32.mrf.mxu0
    %v1589 = vadd.f32 %v1415, %v1588
    %v1590 = vpop.f32.mrf.mxu0
    %1591 = vmatprep.mubr.f32.mxu0 0.0
    %1592 = vmatmul.mubr.f32.gmra.mxu0 %v1391
    %v1593 = vpop.f32.mrf.mxu0
    %v1594 = vadd.f32 %v1415, %v1593
    %v1595 = vpop.f32.mrf.mxu0
    %1596 = vmatprep.mubr.f32.mxu0 0.0
    %1597 = vmatmul.mubr.f32.gmra.mxu0 %v1392
    %v1598 = vpop.f32.mrf.mxu0
    %v1599 = vadd.f32 %v1415, %v1598
    %v1600 = vpop.f32.mrf.mxu0
    %1601 = vmatprep.mubr.f32.mxu0 0.0
    %1602 = vmatmul.mubr.f32.gmra.mxu0 %v1393
    %v1603 = vpop.f32.mrf.mxu0
    %v1604 = vadd.f32 %v1415, %v1603
    %v1605 = vpop.f32.mrf.mxu0
    %1606 = vdwg.mxu0
    %v1607 = vmax.f32 %v1484, 0.0
    %v1608 = vmax.f32 %v1489, 0.0
    %v1609 = vmax.f32 %v1494, 0.0
    %v1610 = vmax.f32 %v1499, 0.0
    %v1611 = vmax.f32 %v1504, 0.0
    %v1612 = vmax.f32 %v1509, 0.0
    %v1613 = vmax.f32 %v1514, 0.0
    %v1614 = vmax.f32 %v1519, 0.0
    %v1615 = vmax.f32 %v1524, 0.0
    %v1616 = vmax.f32 %v1529, 0.0
    %v1617 = vmax.f32 %v1534, 0.0
    %v1618 = vmax.f32 %v1539, 0.0
    %v1619 = vmax.f32 %v1544, 0.0
    %v1620 = vmax.f32 %v1549, 0.0
    %v1621 = vmax.f32 %v1554, 0.0
    %v1622 = vmax.f32 %v1559, 0.0
    %v1623 = vmax.f32 %v1564, 0.0
    %v1624 = vmax.f32 %v1569, 0.0
    %v1625 = vmax.f32 %v1574, 0.0
    %v1626 = vmax.f32 %v1579, 0.0
    %v1627 = vmax.f32 %v1584, 0.0
    %v1628 = vmax.f32 %v1589, 0.0
    %v1629 = vmax.f32 %v1594, 0.0
    %v1630 = vmax.f32 %v1599, 0.0
    %v1631 = vmax.f32 %v1604, 0.0
    %v1632 = vld [vmem:[#allocation10] sm:$0xff]
    %v1633 = vld [vmem:[#allocation10 + $0x8] sm:$0xff]
    %v1634 = vld [vmem:[#allocation10 + $0x10] sm:$0xff]
    %v1635 = vld [vmem:[#allocation10 + $0x18] sm:$0xff]
    %v1636 = vld [vmem:[#allocation10 + $0x20] sm:$0xff]
    %v1637 = vld [vmem:[#allocation10 + $0x28] sm:$0xff]
    %v1638 = vld [vmem:[#allocation10 + $0x30] sm:$0xff]
    %v1639 = vld [vmem:[#allocation10 + $0x38] sm:$0xff]
    %v1640 = vld [vmem:[#allocation10 + $0x40] sm:$0xff]
    %v1641 = vld [vmem:[#allocation10 + $0x48] sm:$0xff]
    %v1642 = vld [vmem:[#allocation10 + $0x50] sm:$0xff]
    %v1643 = vld [vmem:[#allocation10 + $0x58] sm:$0xff]
    %v1644 = vld [vmem:[#allocation10 + $0x60] sm:$0xff]
    %v1645 = vld [vmem:[#allocation10 + $0x68] sm:$0xff]
    %v1646 = vld [vmem:[#allocation10 + $0x70] sm:$0xff]
    %v1647 = vld [vmem:[#allocation10 + $0x78] sm:$0xff]
    %v1648 = vld [vmem:[%s8] sm:$0x1]
    %v1650 = vlaneseq
    %v1651 = vshrl.u32 %v1650, 7
    %v1652 = vsub.s32 0, %v1651
    %v1653 = vrot.slane %v1648, %v1652
    %1655 = vmatprep.subr.mxu0 0.0
    %1656 = vmatpush1.msra.mxu0 %v1647
    %1657 = vmatprep.subr.mxu0 0.0
    %1658 = vmatpush1.msra.mxu0 %v1646
    %1659 = vmatprep.subr.mxu0 0.0
    %1660 = vmatpush1.msra.mxu0 %v1645
    %1661 = vmatprep.subr.mxu0 0.0
    %1662 = vmatpush1.msra.mxu0 %v1644
    %1663 = vmatprep.subr.mxu0 0.0
    %1664 = vmatpush1.msra.mxu0 %v1643
    %1665 = vmatprep.subr.mxu0 0.0
    %1666 = vmatpush1.msra.mxu0 %v1642
    %1667 = vmatprep.subr.mxu0 0.0
    %1668 = vmatpush1.msra.mxu0 %v1641
    %1669 = vmatprep.subr.mxu0 0.0
    %1670 = vmatpush1.msra.mxu0 %v1640
    %1671 = vmatprep.subr.mxu0 0.0
    %1672 = vmatpush1.msra.mxu0 %v1639
    %1673 = vmatprep.subr.mxu0 0.0
    %1674 = vmatpush1.msra.mxu0 %v1638
    %1675 = vmatprep.subr.mxu0 0.0
    %1676 = vmatpush1.msra.mxu0 %v1637
    %1677 = vmatprep.subr.mxu0 0.0
    %1678 = vmatpush1.msra.mxu0 %v1636
    %1679 = vmatprep.subr.mxu0 0.0
    %1680 = vmatpush1.msra.mxu0 %v1635
    %1681 = vmatprep.subr.mxu0 0.0
    %1682 = vmatpush1.msra.mxu0 %v1634
    %1683 = vmatprep.subr.mxu0 0.0
    %1684 = vmatpush1.msra.mxu0 %v1633
    %1685 = vmatprep.subr.mxu0 0.0
    %1686 = vmatpush1.msra.mxu0 %v1632
    %1687 = vmatprep.subr.mxu0 0.0
    %1688 = vmatpush2.msra.mxu0 0.0
    %1689 = vmatprep.subr.mxu0 0.0
    %1690 = vmatpush2.msra.mxu0 0.0
    %1691 = vmatprep.subr.mxu0 0.0
    %1692 = vmatpush2.msra.mxu0 0.0
    %1693 = vmatprep.subr.mxu0 0.0
    %1694 = vmatpush2.msra.mxu0 0.0
    %1695 = vmatprep.subr.mxu0 0.0
    %1696 = vmatpush2.msra.mxu0 0.0
    %1697 = vmatprep.subr.mxu0 0.0
    %1698 = vmatpush2.msra.mxu0 0.0
    %1699 = vmatprep.subr.mxu0 0.0
    %1700 = vmatpush2.msra.mxu0 0.0
    %1701 = vmatprep.subr.mxu0 0.0
    %1702 = vmatpush2.msra.mxu0 0.0
    %1703 = vmatprep.subr.mxu0 0.0
    %1704 = vmatpush2.msra.mxu0 0.0
    %1705 = vmatprep.subr.mxu0 0.0
    %1706 = vmatpush2.msra.mxu0 0.0
    %1707 = vmatprep.subr.mxu0 0.0
    %1708 = vmatpush2.msra.mxu0 0.0
    %1709 = vmatprep.subr.mxu0 0.0
    %1710 = vmatpush2.msra.mxu0 0.0
    %1711 = vmatprep.subr.mxu0 0.0
    %1712 = vmatpush2.msra.mxu0 0.0
    %1713 = vmatprep.subr.mxu0 0.0
    %1714 = vmatpush2.msra.mxu0 0.0
    %1715 = vmatprep.subr.mxu0 0.0
    %1716 = vmatpush2.msra.mxu0 0.0
    %1717 = vmatprep.subr.mxu0 0.0
    %1718 = vmatpush2.msra.mxu0 0.0
    %1719 = vmatprep.mubr.f32.mxu0 0.0
    %1720 = vmatmul.mubr.f32.gmra.mxu0 %v1607
    %v1721 = vpop.f32.mrf.mxu0
    %v1722 = vadd.f32 %v1653, %v1721
    %v1723 = vpop.f32.mrf.mxu0
    %1724 = vmatprep.mubr.f32.mxu0 0.0
    %1725 = vmatmul.mubr.f32.gmra.mxu0 %v1608
    %v1726 = vpop.f32.mrf.mxu0
    %v1727 = vadd.f32 %v1653, %v1726
    %v1728 = vpop.f32.mrf.mxu0
    %1729 = vmatprep.mubr.f32.mxu0 0.0
    %1730 = vmatmul.mubr.f32.gmra.mxu0 %v1609
    %v1731 = vpop.f32.mrf.mxu0
    %v1732 = vadd.f32 %v1653, %v1731
    %v1733 = vpop.f32.mrf.mxu0
    %1734 = vmatprep.mubr.f32.mxu0 0.0
    %1735 = vmatmul.mubr.f32.gmra.mxu0 %v1610
    %v1736 = vpop.f32.mrf.mxu0
    %v1737 = vadd.f32 %v1653, %v1736
    %v1738 = vpop.f32.mrf.mxu0
    %1739 = vmatprep.mubr.f32.mxu0 0.0
    %1740 = vmatmul.mubr.f32.gmra.mxu0 %v1611
    %v1741 = vpop.f32.mrf.mxu0
    %v1742 = vadd.f32 %v1653, %v1741
    %v1743 = vpop.f32.mrf.mxu0
    %1744 = vmatprep.mubr.f32.mxu0 0.0
    %1745 = vmatmul.mubr.f32.gmra.mxu0 %v1612
    %v1746 = vpop.f32.mrf.mxu0
    %v1747 = vadd.f32 %v1653, %v1746
    %v1748 = vpop.f32.mrf.mxu0
    %1749 = vmatprep.mubr.f32.mxu0 0.0
    %1750 = vmatmul.mubr.f32.gmra.mxu0 %v1613
    %v1751 = vpop.f32.mrf.mxu0
    %v1752 = vadd.f32 %v1653, %v1751
    %v1753 = vpop.f32.mrf.mxu0
    %1754 = vmatprep.mubr.f32.mxu0 0.0
    %1755 = vmatmul.mubr.f32.gmra.mxu0 %v1614
    %v1756 = vpop.f32.mrf.mxu0
    %v1757 = vadd.f32 %v1653, %v1756
    %v1758 = vpop.f32.mrf.mxu0
    %1759 = vmatprep.mubr.f32.mxu0 0.0
    %1760 = vmatmul.mubr.f32.gmra.mxu0 %v1615
    %v1761 = vpop.f32.mrf.mxu0
    %v1762 = vadd.f32 %v1653, %v1761
    %v1763 = vpop.f32.mrf.mxu0
    %1764 = vmatprep.mubr.f32.mxu0 0.0
    %1765 = vmatmul.mubr.f32.gmra.mxu0 %v1616
    %v1766 = vpop.f32.mrf.mxu0
    %v1767 = vadd.f32 %v1653, %v1766
    %v1768 = vpop.f32.mrf.mxu0
    %1769 = vmatprep.mubr.f32.mxu0 0.0
    %1770 = vmatmul.mubr.f32.gmra.mxu0 %v1617
    %v1771 = vpop.f32.mrf.mxu0
    %v1772 = vadd.f32 %v1653, %v1771
    %v1773 = vpop.f32.mrf.mxu0
    %1774 = vmatprep.mubr.f32.mxu0 0.0
    %1775 = vmatmul.mubr.f32.gmra.mxu0 %v1618
    %v1776 = vpop.f32.mrf.mxu0
    %v1777 = vadd.f32 %v1653, %v1776
    %v1778 = vpop.f32.mrf.mxu0
    %1779 = vmatprep.mubr.f32.mxu0 0.0
    %1780 = vmatmul.mubr.f32.gmra.mxu0 %v1619
    %v1781 = vpop.f32.mrf.mxu0
    %v1782 = vadd.f32 %v1653, %v1781
    %v1783 = vpop.f32.mrf.mxu0
    %1784 = vmatprep.mubr.f32.mxu0 0.0
    %1785 = vmatmul.mubr.f32.gmra.mxu0 %v1620
    %v1786 = vpop.f32.mrf.mxu0
    %v1787 = vadd.f32 %v1653, %v1786
    %v1788 = vpop.f32.mrf.mxu0
    %1789 = vmatprep.mubr.f32.mxu0 0.0
    %1790 = vmatmul.mubr.f32.gmra.mxu0 %v1621
    %v1791 = vpop.f32.mrf.mxu0
    %v1792 = vadd.f32 %v1653, %v1791
    %v1793 = vpop.f32.mrf.mxu0
    %1794 = vmatprep.mubr.f32.mxu0 0.0
    %1795 = vmatmul.mubr.f32.gmra.mxu0 %v1622
    %v1796 = vpop.f32.mrf.mxu0
    %v1797 = vadd.f32 %v1653, %v1796
    %v1798 = vpop.f32.mrf.mxu0
    %1799 = vmatprep.mubr.f32.mxu0 0.0
    %1800 = vmatmul.mubr.f32.gmra.mxu0 %v1623
    %v1801 = vpop.f32.mrf.mxu0
    %v1802 = vadd.f32 %v1653, %v1801
    %v1803 = vpop.f32.mrf.mxu0
    %1804 = vmatprep.mubr.f32.mxu0 0.0
    %1805 = vmatmul.mubr.f32.gmra.mxu0 %v1624
    %v1806 = vpop.f32.mrf.mxu0
    %v1807 = vadd.f32 %v1653, %v1806
    %v1808 = vpop.f32.mrf.mxu0
    %1809 = vmatprep.mubr.f32.mxu0 0.0
    %1810 = vmatmul.mubr.f32.gmra.mxu0 %v1625
    %v1811 = vpop.f32.mrf.mxu0
    %v1812 = vadd.f32 %v1653, %v1811
    %v1813 = vpop.f32.mrf.mxu0
    %1814 = vmatprep.mubr.f32.mxu0 0.0
    %1815 = vmatmul.mubr.f32.gmra.mxu0 %v1626
    %v1816 = vpop.f32.mrf.mxu0
    %v1817 = vadd.f32 %v1653, %v1816
    %v1818 = vpop.f32.mrf.mxu0
    %1819 = vmatprep.mubr.f32.mxu0 0.0
    %1820 = vmatmul.mubr.f32.gmra.mxu0 %v1627
    %v1821 = vpop.f32.mrf.mxu0
    %v1822 = vadd.f32 %v1653, %v1821
    %v1823 = vpop.f32.mrf.mxu0
    %1824 = vmatprep.mubr.f32.mxu0 0.0
    %1825 = vmatmul.mubr.f32.gmra.mxu0 %v1628
    %v1826 = vpop.f32.mrf.mxu0
    %v1827 = vadd.f32 %v1653, %v1826
    %v1828 = vpop.f32.mrf.mxu0
    %1829 = vmatprep.mubr.f32.mxu0 0.0
    %1830 = vmatmul.mubr.f32.gmra.mxu0 %v1629
    %v1831 = vpop.f32.mrf.mxu0
    %v1832 = vadd.f32 %v1653, %v1831
    %v1833 = vpop.f32.mrf.mxu0
    %1834 = vmatprep.mubr.f32.mxu0 0.0
    %1835 = vmatmul.mubr.f32.gmra.mxu0 %v1630
    %v1836 = vpop.f32.mrf.mxu0
    %v1837 = vadd.f32 %v1653, %v1836
    %v1838 = vpop.f32.mrf.mxu0
    %1839 = vmatprep.mubr.f32.mxu0 0.0
    %1840 = vmatmul.mubr.f32.gmra.mxu0 %v1631
    %v1841 = vpop.f32.mrf.mxu0
    %v1842 = vadd.f32 %v1653, %v1841
    %v1843 = vpop.f32.mrf.mxu0
    %1844 = vdwg.mxu0
    %1845 = vst [vmem:[#allocation11] sm:$0xff] %v1722
    %1846 = vst [vmem:[#allocation11 + $0x8] sm:$0xff] %v1727
    %1847 = vst [vmem:[#allocation11 + $0x10] sm:$0xff] %v1732
    %1848 = vst [vmem:[#allocation11 + $0x18] sm:$0xff] %v1737
    %1849 = vst [vmem:[#allocation11 + $0x20] sm:$0xff] %v1742
    %1850 = vst [vmem:[#allocation11 + $0x28] sm:$0xff] %v1747
    %1851 = vst [vmem:[#allocation11 + $0x30] sm:$0xff] %v1752
    %1852 = vst [vmem:[#allocation11 + $0x38] sm:$0xff] %v1757
    %1853 = vst [vmem:[#allocation11 + $0x40] sm:$0xff] %v1762
    %1854 = vst [vmem:[#allocation11 + $0x48] sm:$0xff] %v1767
    %1855 = vst [vmem:[#allocation11 + $0x50] sm:$0xff] %v1772
    %1856 = vst [vmem:[#allocation11 + $0x58] sm:$0xff] %v1777
    %1857 = vst [vmem:[#allocation11 + $0x60] sm:$0xff] %v1782
    %1858 = vst [vmem:[#allocation11 + $0x68] sm:$0xff] %v1787
    %1859 = vst [vmem:[#allocation11 + $0x70] sm:$0xff] %v1792
    %1860 = vst [vmem:[#allocation11 + $0x78] sm:$0xff] %v1797
    %1861 = vst [vmem:[#allocation11 + $0x80] sm:$0xff] %v1802
    %1862 = vst [vmem:[#allocation11 + $0x88] sm:$0xff] %v1807
    %1863 = vst [vmem:[#allocation11 + $0x90] sm:$0xff] %v1812
    %1864 = vst [vmem:[#allocation11 + $0x98] sm:$0xff] %v1817
    %1865 = vst [vmem:[#allocation11 + $0xa0] sm:$0xff] %v1822
    %1866 = vst [vmem:[#allocation11 + $0xa8] sm:$0xff] %v1827
    %1867 = vst [vmem:[#allocation11 + $0xb0] sm:$0xff] %v1832
    %1868 = vst [vmem:[#allocation11 + $0xb8] sm:$0xff] %v1837
    %1869 = vst [vmem:[#allocation11 + $0xc0] sm:$0xff] %v1842
    // Predicated region
    $region58: #{tpu_custom_call.1} parent=1 // pred_check
      _
    $region59: #{tpu_custom_call.1} parent=1 // pred_check_branch
      %1871 = sbr.rel (0) target = $region61
    $region60: #{tpu_custom_call.1} parent=1 // pred_region
      %s1873 = ssub.s32 3200, 3200
      %1874 = vsyncadd [#allocation4], %s1873
      %s1875 = sshll.u32 [#allocation11], 4
      %s1876 = int_to_ptr.vmem [resolvable:$true] %s1875
      %1881 = dma.vmem_to_hbm [thread:$0]  %s1876, 3200, %s9, [#allocation4], 128, 128, 8
    $region61: #{tpu_custom_call.1} parent=1 // pred_fallthru
      _
    // Predicated region
    $region62: #{tpu_custom_call.1} parent=1 // pred_check
      _
    $region63: #{tpu_custom_call.1} parent=1 // pred_check_branch
      %1883 = sbr.rel (0) target = $region65
    $region64: #{tpu_custom_call.1} parent=1 // pred_region
      %1884 = dma.done [#allocation4], 3200
    $region65: #{tpu_custom_call.1} parent=1 // pred_fallthru
      _
    %1885 = vsyncpa [#allocation3], 1
    %1886 = vsyncpa [#allocation6], 1
    %1887 = vsyncpa [#allocation9], 1
    %1888 = vsyncpa [#allocation4], 1

</llo_original>
